<compile_context>
chip_gen: v5e
topology: v5e:2x2
jax: 0.10.0
libtpu: 0.0.40
codegen_flags: <defaults>
</compile_context>

<pallas_src>
import jax
import jax.numpy as jnp
from jax.experimental import pallas as pl
from jax.experimental.pallas import tpu as pltpu


def _self_attention_kernel(x_ref, mt_ref, wkbq_ref, wv_ref, bv_ref, o_ref, xt_sc, v_sc):
    f32 = jnp.float32
    bf16 = jnp.bfloat16

    qi = pl.program_id(1)
    tq = o_ref.shape[2]

    # ---- Per-batch precompute (hoisted out of the qi loop) -------------------------------
    @pl.when(qi == 0)
    def _():
        x_cn = x_ref[0]                                   # (C, N) bf16, resident across qi
        xt_sc[...] = x_cn.T                               # (N, C) bf16  (one XLU transpose / batch)
        v_sc[...] = (jnp.dot(wv_ref[...], x_cn,           # (C, N) value projection, once / batch
                             preferred_element_type=f32) + bv_ref[...]).astype(bf16)

    # ---- Query tile: slice from the already-resident x block (no separate DMA) -----------
    start = pl.multiple_of(qi * tq, tq)
    xq_cn = x_ref[0, :, pl.ds(start, tq)]                 # (C, tq) bf16

    # Fused query-side projection: u_i = (Wk^T Wq) x_i + Wk^T bq               -> (C, tq) f32
    u = jnp.dot(mt_ref[...], xq_cn, preferred_element_type=f32) + wkbq_ref[...]

    # Scores, already transposed: sT[j, i] = x_j . u_i = (Wq x_i + bq).(Wk x_j) -> (N, tq)
    sT = jnp.dot(xt_sc[...], u.astype(bf16), preferred_element_type=f32)

    # Softmax over the key axis j (axis 0), f32 math (v5e-safe), late normalization.
    sT = sT - jnp.max(sT, axis=0, keepdims=True)
    p = jnp.exp(sT)                                       # (N, tq) f32
    l = jnp.sum(p, axis=0, keepdims=True)                 # (1, tq)

    # out[:, i] = (1/l_i) * sum_j v[:, j] * p[j, i]       -> (C, tq), lane-dense
    o = jnp.dot(v_sc[...], p.astype(bf16), preferred_element_type=f32)
    o_ref[0] = (o * pl.reciprocal(l, approx=True)).astype(o_ref.dtype)


def _vmem_capacity_bytes():
    try:
        return int(pltpu.get_tpu_info().vmem_capacity_bytes)
    except Exception:
        return 64 * 2**20   # conservative default (v7x per-TC)


def _vmem_estimate_bytes(c, n, tq):
    """Rough per-invocation VMEM footprint (sizing hint, not exact)."""
    bf, f4 = 2, 4
    x_blocks = 2 * c * n * bf                 # double-buffered resident x block (bf16)
    out_blk = 2 * c * tq * f4                 # double-buffered output tile (f32)
    weights = 2 * (2 * c * c * bf + 2 * c * f4)   # mt, wv (+ biases), double-buffered
    scratch = 2 * c * n * bf                  # x^T and v scratch (bf16)
    temps = 3 * n * tq * f4 + n * tq * bf + 4 * c * tq * f4   # sT / p / casts / u / o
    return x_blocks + out_blk + weights + scratch + temps


def _pick_query_tile(n, c, vmem_budget):
    for t in (512, 256, 128):
        if n % t == 0 and _vmem_estimate_bytes(c, n, t) <= vmem_budget:
            return t
    for t in (256, 128):   # fall back to the smallest legal tile even if over budget
        if n % t == 0:
            return t
    return n               # small / odd N: single full-width tile (block == full dim is legal)


def self_attention_pallas(x_nchw, wq, bq, wk, bk, wv, bv):
    """x_nchw: (B, C, H, W) f32.  wq/wk: (C//8, C), wv: (C, C), biases 1-D (PyTorch conv1x1)."""
    del bk  # bk only produces terms constant over the softmax axis -> cancels exactly.
    B, C, H, W = x_nchw.shape
    N = H * W

    # (B, C, H, W) -> (B, C, N) is a free reshape; cast to bf16 once (x is only an MXU operand).
    x_bcn = x_nchw.reshape(B, C, N).astype(jnp.bfloat16)

    # Fold the q/k 1x1 convs into one C x C score matrix + the k-side bias cross-term.
    mt = (wk.T @ wq).astype(jnp.bfloat16)                   # (C, C)  == (Wq^T Wk)^T
    wkbq = (wk.T @ bq).reshape(C, 1).astype(jnp.float32)    # (C, 1)  -> bq . (Wk x_j)
    wv_b = wv.astype(jnp.bfloat16)                          # (C, C)
    bv_c = bv.reshape(C, 1).astype(jnp.float32)             # (C, 1)

    vmem_cap = _vmem_capacity_bytes()
    tq = _pick_query_tile(N, C, int(0.70 * vmem_cap))
    nq = N // tq

    est = _vmem_estimate_bytes(C, N, tq)
    vmem_limit = int(min(int(0.75 * vmem_cap), max(32 * 2**20, 2 * est)))

    out_bcn = pl.pallas_call(
        _self_attention_kernel,
        out_shape=jax.ShapeDtypeStruct((B, C, N), x_nchw.dtype),
        grid_spec=pltpu.PrefetchScalarGridSpec(
            num_scalar_prefetch=0,
            grid=(B, nq),
            in_specs=[
                pl.BlockSpec((1, C, N), lambda b, qi: (b, 0, 0)),   # x: keys/values + query slices
                pl.BlockSpec((C, C), lambda b, qi: (0, 0)),         # Wk^T Wq  (bf16)
                pl.BlockSpec((C, 1), lambda b, qi: (0, 0)),         # Wk^T bq
                pl.BlockSpec((C, C), lambda b, qi: (0, 0)),         # Wv       (bf16)
                pl.BlockSpec((C, 1), lambda b, qi: (0, 0)),         # bv
            ],
            out_specs=pl.BlockSpec((1, C, tq), lambda b, qi: (b, 0, qi)),
            scratch_shapes=[
                pltpu.VMEM((N, C), jnp.bfloat16),                   # x^T  (per-batch, hoisted)
                pltpu.VMEM((C, N), jnp.bfloat16),                   # v = Wv x + bv (per-batch)
            ],
        ),
        compiler_params=pltpu.CompilerParams(
            # qi carries the per-batch scratch -> "arbitrary"; B stays "parallel" for megacore.
            dimension_semantics=("parallel", "arbitrary"),
            vmem_limit_bytes=vmem_limit,
        ),
    )(x_bcn, mt, wkbq, wv_b, bv_c)

    # (B, C, N) -> (B, C, H, W): free reshape, no transpose.
    return out_bcn.reshape(B, C, H, W)


def self_attention_ref(x_nchw, wq, bq, wk, bk, wv, bv):
    """Pure-JAX f32 reference mirroring the PyTorch forward exactly."""
    B, C, H, W = x_nchw.shape
    N = H * W
    xf = x_nchw.reshape(B, C, N)                                  # (B, C, N)
    q = jnp.einsum("oc,bcn->bon", wq, xf) + bq[None, :, None]     # (B, Cq, N)
    k = jnp.einsum("oc,bcn->bon", wk, xf) + bk[None, :, None]     # (B, Cq, N)
    v = jnp.einsum("oc,bcn->bon", wv, xf) + bv[None, :, None]     # (B, C, N)
    attn = jax.nn.softmax(jnp.einsum("bcn,bcm->bnm", q, k), axis=-1)   # (B, N, N)
    out = jnp.einsum("bcn,bmn->bcm", v, attn)                     # (B, C, N)
    return out.reshape(B, C, H, W)


if __name__ == "__main__":
    B, C, H, W = 2, 32, 16, 16      # in_channels must be a multiple of 8 (C//8 q/k channels)
    Cq = C // 8

    key = jax.random.PRNGKey(0)
    kx, kwq, kbq, kwk, kbk, kwv, kbv = jax.random.split(key, 7)

    x = jax.random.normal(kx, (B, C, H, W), dtype=jnp.float32)

    # Deterministic param init (uniform, conv1x1 weights stored as (out_ch, in_ch))
    bound = 1.0 / (C ** 0.5)
    wq = jax.random.uniform(kwq, (Cq, C), jnp.float32, -bound, bound)
    bq = jax.random.uniform(kbq, (Cq,),   jnp.float32, -bound, bound)
    wk = jax.random.uniform(kwk, (Cq, C), jnp.float32, -bound, bound)
    bk = jax.random.uniform(kbk, (Cq,),   jnp.float32, -bound, bound)
    wv = jax.random.uniform(kwv, (C, C),  jnp.float32, -bound, bound)
    bv = jax.random.uniform(kbv, (C,),    jnp.float32, -bound, bound)

    out = self_attention_pallas(x, wq, bq, wk, bk, wv, bv)
    out = jax.block_until_ready(out)

    ref = self_attention_ref(x, wq, bq, wk, bk, wv, bv)
    assert out.shape == (B, C, H, W)
    # bf16 MXU operands with f32 accumulation + approx reciprocal -> mixed-precision tolerance.
    assert jnp.allclose(out, ref, atol=2e-2, rtol=2e-2), "mismatch vs reference"

    print("KERNEL_OK")
</pallas_src>

<mosaic_0001>
module attributes {stable_mosaic.version = 11 : i64} {
  func.func @_self_attention_kernel(%arg0: i32, %arg1: i32, %arg2: memref<1x32x256xbf16, #tpu.memory_space<vmem>>, %arg3: memref<32x32xbf16, #tpu.memory_space<vmem>>, %arg4: memref<32x1xf32, #tpu.memory_space<vmem>>, %arg5: memref<32x32xbf16, #tpu.memory_space<vmem>>, %arg6: memref<32x1xf32, #tpu.memory_space<vmem>>, %arg7: memref<1x32x256xf32, #tpu.memory_space<vmem>>, %arg8: memref<256x32xbf16, #tpu.memory_space<vmem>>, %arg9: memref<32x256xbf16, #tpu.memory_space<vmem>>) attributes {dimension_semantics = [#tpu.dimension_semantics<parallel>, #tpu.dimension_semantics<arbitrary>], iteration_bounds = array<i64: 2, 1>, scalar_prefetch = 0 : i64, scratch_operands = 2 : i64, tpu.core_type = #tpu.core_type<tc>, window_params = [{transform_indices = @transform_0, window_bounds = array<i64: 1, 32, 256>}, {pipeline_mode = #tpu.pipeline_mode<synchronous>, transform_indices = @transform_1, window_bounds = array<i64: 32, 32>}, {pipeline_mode = #tpu.pipeline_mode<synchronous>, transform_indices = @transform_2, window_bounds = array<i64: 32, 1>}, {pipeline_mode = #tpu.pipeline_mode<synchronous>, transform_indices = @transform_3, window_bounds = array<i64: 32, 32>}, {pipeline_mode = #tpu.pipeline_mode<synchronous>, transform_indices = @transform_4, window_bounds = array<i64: 32, 1>}, {transform_indices = @transform_5, window_bounds = array<i64: 1, 32, 256>}]} {
    %c0_i32 = arith.constant 0 : i32
    %0 = arith.cmpi eq, %arg1, %c0_i32 : i32
    %1 = arith.extui %0 : i1 to i32
    %c0_i32_0 = arith.constant 0 : i32
    %2 = arith.cmpi ne, %1, %c0_i32_0 : i32
    scf.if %2 {
      %c0_17 = arith.constant 0 : index
      %c0_18 = arith.constant 0 : index
      %c0_19 = arith.constant 0 : index
      %32 = vector.load %arg2[%c0_17, %c0_18, %c0_19] : memref<1x32x256xbf16, #tpu.memory_space<vmem>>, vector<1x32x256xbf16>
      %33 = vector.shape_cast %32 : vector<1x32x256xbf16> to vector<32x256xbf16>
      %34 = tpu.transpose %33, [1, 0] : vector<32x256xbf16> -> vector<256x32xbf16>
      %c0_20 = arith.constant 0 : index
      %c0_21 = arith.constant 0 : index
      %35 = vector.load %arg8[%c0_20, %c0_21] : memref<256x32xbf16, #tpu.memory_space<vmem>>, vector<256x32xbf16>
      tpu.vector_store %arg8[%c0_20, %c0_21], %34 {strides = array<i32>} : memref<256x32xbf16, #tpu.memory_space<vmem>>, vector<256x32xbf16>,
      %c0_22 = arith.constant 0 : index
      %c0_23 = arith.constant 0 : index
      %36 = vector.load %arg5[%c0_22, %c0_23] : memref<32x32xbf16, #tpu.memory_space<vmem>>, vector<32x32xbf16>
      %cst_24 = arith.constant dense<0.000000e+00> : vector<32x256xf32>
      %37 = tpu.matmul %36, %33, %cst_24 {dimension_numbers = #tpu.dot_dimension_numbers<[1], [0], [0], [1], [0, 0, 1, 1], [], []>} : vector<32x32xbf16>, vector<32x256xbf16>, vector<32x256xf32> -> vector<32x256xf32>
      %c0_25 = arith.constant 0 : index
      %c0_26 = arith.constant 0 : index
      %38 = vector.load %arg6[%c0_25, %c0_26] : memref<32x1xf32, #tpu.memory_space<vmem>>, vector<32x1xf32>
      %39 = vector.broadcast %38 : vector<32x1xf32> to vector<32x256xf32>
      %40 = arith.addf %37, %39 : vector<32x256xf32>
      %41 = arith.truncf %40 : vector<32x256xf32> to vector<32x256xbf16>
      %c0_27 = arith.constant 0 : index
      %c0_28 = arith.constant 0 : index
      %42 = vector.load %arg9[%c0_27, %c0_28] : memref<32x256xbf16, #tpu.memory_space<vmem>>, vector<32x256xbf16>
      tpu.vector_store %arg9[%c0_27, %c0_28], %41 {strides = array<i32>} : memref<32x256xbf16, #tpu.memory_space<vmem>>, vector<32x256xbf16>,
    } else {
    }
    %c256_i32 = arith.constant 256 : i32
    %3 = arith.muli %arg1, %c256_i32 : i32
    %4 = tpu.assume_multiple %3, 256 : i32
    %c0 = arith.constant 0 : index
    %c0_1 = arith.constant 0 : index
    %5 = arith.index_cast %4 : i32 to index
    %6 = vector.load %arg2[%c0, %c0_1, %5] : memref<1x32x256xbf16, #tpu.memory_space<vmem>>, vector<1x32x256xbf16>
    %7 = vector.shape_cast %6 : vector<1x32x256xbf16> to vector<32x256xbf16>
    %c0_2 = arith.constant 0 : index
    %c0_3 = arith.constant 0 : index
    %8 = vector.load %arg3[%c0_2, %c0_3] : memref<32x32xbf16, #tpu.memory_space<vmem>>, vector<32x32xbf16>
    %cst = arith.constant dense<0.000000e+00> : vector<32x256xf32>
    %9 = tpu.matmul %8, %7, %cst {dimension_numbers = #tpu.dot_dimension_numbers<[1], [0], [0], [1], [0, 0, 1, 1], [], []>} : vector<32x32xbf16>, vector<32x256xbf16>, vector<32x256xf32> -> vector<32x256xf32>
    %c0_4 = arith.constant 0 : index
    %c0_5 = arith.constant 0 : index
    %10 = vector.load %arg4[%c0_4, %c0_5] : memref<32x1xf32, #tpu.memory_space<vmem>>, vector<32x1xf32>
    %11 = vector.broadcast %10 : vector<32x1xf32> to vector<32x256xf32>
    %12 = arith.addf %9, %11 : vector<32x256xf32>
    %c0_6 = arith.constant 0 : index
    %c0_7 = arith.constant 0 : index
    %13 = vector.load %arg8[%c0_6, %c0_7] : memref<256x32xbf16, #tpu.memory_space<vmem>>, vector<256x32xbf16>
    %14 = arith.truncf %12 : vector<32x256xf32> to vector<32x256xbf16>
    %cst_8 = arith.constant dense<0.000000e+00> : vector<256x256xf32>
    %15 = tpu.matmul %13, %14, %cst_8 {dimension_numbers = #tpu.dot_dimension_numbers<[1], [0], [0], [1], [0, 0, 1, 1], [], []>} : vector<256x32xbf16>, vector<32x256xbf16>, vector<256x256xf32> -> vector<256x256xf32>
    %cst_9 = arith.constant dense<0xFF800000> : vector<256xf32>
    %16 = vector.multi_reduction <maximumf>, %15, %cst_9 [0] : vector<256x256xf32> to vector<256xf32>
    %17 = vector.shape_cast %16 : vector<256xf32> to vector<1x256xf32>
    %18 = vector.broadcast %17 : vector<1x256xf32> to vector<256x256xf32>
    %19 = arith.subf %15, %18 : vector<256x256xf32>
    %20 = math.exp %19 : vector<256x256xf32>
    %cst_10 = arith.constant dense<0.000000e+00> : vector<256xf32>
    %21 = vector.multi_reduction <add>, %20, %cst_10 [0] : vector<256x256xf32> to vector<256xf32>
    %22 = vector.shape_cast %21 : vector<256xf32> to vector<1x256xf32>
    %c0_11 = arith.constant 0 : index
    %c0_12 = arith.constant 0 : index
    %23 = vector.load %arg9[%c0_11, %c0_12] : memref<32x256xbf16, #tpu.memory_space<vmem>>, vector<32x256xbf16>
    %24 = arith.truncf %20 : vector<256x256xf32> to vector<256x256xbf16>
    %cst_13 = arith.constant dense<0.000000e+00> : vector<32x256xf32>
    %25 = tpu.matmul %23, %24, %cst_13 {dimension_numbers = #tpu.dot_dimension_numbers<[1], [0], [0], [1], [0, 0, 1, 1], [], []>} : vector<32x256xbf16>, vector<256x256xbf16>, vector<32x256xf32> -> vector<32x256xf32>
    %26 = tpu.reciprocal %22 {approx = true} : vector<1x256xf32> -> vector<1x256xf32>
    %27 = vector.broadcast %26 : vector<1x256xf32> to vector<32x256xf32>
    %28 = arith.mulf %25, %27 : vector<32x256xf32>
    %c0_14 = arith.constant 0 : index
    %c0_15 = arith.constant 0 : index
    %c0_16 = arith.constant 0 : index
    %29 = vector.load %arg7[%c0_14, %c0_15, %c0_16] : memref<1x32x256xf32, #tpu.memory_space<vmem>>, vector<1x32x256xf32>
    %30 = vector.shape_cast %29 : vector<1x32x256xf32> to vector<32x256xf32>
    %31 = vector.shape_cast %28 : vector<32x256xf32> to vector<1x32x256xf32>
    tpu.vector_store %arg7[%c0_14, %c0_15, %c0_16], %31 {strides = array<i32>} : memref<1x32x256xf32, #tpu.memory_space<vmem>>, vector<1x32x256xf32>,
    return
  }
  func.func @transform_0(%arg0: i32, %arg1: i32) -> (i32, i32, i32) {
    %c0_i32 = arith.constant 0 : i32
    %c0_i32_0 = arith.constant 0 : i32
    %c0_i32_1 = arith.constant 0 : i32
    return %arg0, %c0_i32, %c0_i32_0 : i32, i32, i32
  }
  func.func @transform_1(%arg0: i32, %arg1: i32) -> (i32, i32) {
    %c0_i32 = arith.constant 0 : i32
    %c0_i32_0 = arith.constant 0 : i32
    %c0_i32_1 = arith.constant 0 : i32
    return %c0_i32, %c0_i32_0 : i32, i32
  }
  func.func @transform_2(%arg0: i32, %arg1: i32) -> (i32, i32) {
    %c0_i32 = arith.constant 0 : i32
    %c0_i32_0 = arith.constant 0 : i32
    %c0_i32_1 = arith.constant 0 : i32
    return %c0_i32, %c0_i32_0 : i32, i32
  }
  func.func @transform_3(%arg0: i32, %arg1: i32) -> (i32, i32) {
    %c0_i32 = arith.constant 0 : i32
    %c0_i32_0 = arith.constant 0 : i32
    %c0_i32_1 = arith.constant 0 : i32
    return %c0_i32, %c0_i32_0 : i32, i32
  }
  func.func @transform_4(%arg0: i32, %arg1: i32) -> (i32, i32) {
    %c0_i32 = arith.constant 0 : i32
    %c0_i32_0 = arith.constant 0 : i32
    %c0_i32_1 = arith.constant 0 : i32
    return %c0_i32, %c0_i32_0 : i32, i32
  }
  func.func @transform_5(%arg0: i32, %arg1: i32) -> (i32, i32, i32) {
    %c0_i32 = arith.constant 0 : i32
    %c0_i32_0 = arith.constant 0 : i32
    return %arg0, %c0_i32, %arg1 : i32, i32, i32
  }
}

</mosaic_0001>

<llo_original>
// kernel: tpu_custom_call.1
$region0: #{tpu_custom_call.1}
  #allocation0 [shape = 'u32[]', space=smem, size = 0x4, offset = 0x4, fixed_abs, tag = 'smem constant byte address 0x4 - core index']
  #allocation1 [shape = 'u32[72,128]{1,0:T(1,128)}', space=vmem, size = 0x9000, scoped, tag = 'internal scratch']
  #allocation2 [shape = 'bf16[256,32]{1,0:T(8,128)(2,1)}', space=vmem, size = 0x10000, scoped, tag = 'scratch operand']
  #allocation3 [shape = 'bf16[32,256]{1,0:T(8,128)(2,1)}', space=vmem, size = 0x4000, scoped, tag = 'scratch operand']
  %s0 = inlined_call_operand.vmem [shape: bf16[2,32,256], index: 0, kind: input, shape index: {}]
  %s1 = inlined_call_operand.hbm [shape: bf16[32,32], index: 1, kind: input, shape index: {}]
  %s2 = inlined_call_operand.vmem [shape: f32[32,1], index: 2, kind: input, shape index: {}]
  %s3 = inlined_call_operand.hbm [shape: bf16[32,32], index: 3, kind: input, shape index: {}]
  %s4 = inlined_call_operand.vmem [shape: f32[32,1], index: 4, kind: input, shape index: {}]
  %s5 = inlined_call_operand.hbm [shape: f32[2,32,256], index: 5, kind: output, shape index: {}]
  %s6 = sld [smem:[#allocation0]]
  $region65: #{tpu_custom_call.1} parent=0
    _
  %s8 = ssub.s32 1, %s6
  %s9 = scalar_select 0, %s8, %s6
  $region1: #{tpu_custom_call.1} parent=0
    #allocation4 [shape = 'u8[8192]{0}', space=vmem, size = 0x2000, scoped, tag = 'input window, operand 1, single buffered']
    #allocation5 [shape = 's32[2]{0}', space=sflag, size = 0x8, scoped, tag = 'scoped memory for tpu_custom_call.1']
    #allocation6 [shape = 's32[2]{0}', space=sflag, size = 0x8, scoped, tag = 'scoped memory for tpu_custom_call.1']
    #allocation7 [shape = 'u8[8192]{0}', space=vmem, size = 0x2000, scoped, tag = 'input window, operand 3, single buffered']
    #allocation8 [shape = 's32[1]{0}', space=sflag, size = 0x4, scoped, tag = 'scoped memory for tpu_custom_call.1']
    #allocation9 [shape = 'u8[65536]{0}', space=vmem, size = 0x10000, scoped, tag = 'output window, operand 0']
    %10 = vsyncpa [#allocation5], 0
    %11 = vsyncpa [#allocation8], 0
    %12 = vsyncpa [#allocation6], 0
    %s13 = scalar_lea.sflag [#allocation6], 1
    %14 = vsyncpa %s13, 0
    loop: start=0, step=1, limit=4
    $region2: #{tpu_custom_call.1} parent=1 // loop_pre_header
      _
    $region3: #{tpu_custom_call.1} parent=1 // loop_header
      %s16 = sphi 0, %s20
      %p17 = scmp.ge.s32.totalorder %s16, 4
      %s23 = sphi 0, %s35
      %s24 = sphi 0, %s31
      %s25 = sphi 0, %s23
      %s26 = sphi 0, %s24
      %s27 = sphi 0, %s25
      %s28 = sphi 0, %s26
      %s38 = sphi 0, %s40
      %s41 = sphi 0, %s38
      %s42 = sphi 0, %s41
      %s58 = sphi 0, %s42
      %s62 = sphi 0, %s62
      %s64 = sphi 0, %s62
      %s65 = sphi 0, %s64
      %s79 = sphi 0, %s65
      %s83 = sphi 0, %s83
      %s85 = sphi 0, %s83
      %s86 = sphi 0, %s85
      %s100 = sphi 0, %s86
      %s104 = sphi 0, %s104
      %s106 = sphi 0, %s104
      %s107 = sphi 0, %s106
      %s121 = sphi 0, %s107
      %s125 = sphi 0, %s125
      %s127 = sphi 0, %s125
      %s128 = sphi 0, %s127
      %s142 = sphi 0, %s128
      %s150 = sphi 0, %s152
      %s153 = sphi 0, %s150
      %s154 = sphi 0, %s153
      %s170 = sphi 0, %s154
    $region4: #{tpu_custom_call.1} parent=1 // loop_header_branch
      %19 = sbr.rel (%p17) target = $region8
    $region5: #{tpu_custom_call.1} parent=1 // loop_body
      %s21 = ssub.s32 %s16, 1
      %s22 = ssub.s32 %s16, 2
      %s29 = sadd.s32 1, %s24
      %p30 = scmp.ge.s32.totalorder %s29, 1
      %s31 = scalar_select %p30, 0, %s29
      %s32 = sadd.s32 1, %s23
      %s33 = scalar_select %p30, %s32, %s23
      %p34 = scmp.ge.s32.totalorder %s33, 2
      %s35 = scalar_select %p34, 0, %s33
      %s36 = ssub.s32 %s23, %s35
      %p37 = scmp.eq.s32.totalorder %s36, 0
      %s39 = sadd.s32 %s38, 1
      %s40 = scalar_select %p37, %s38, %s39
      %p43 = pneg %p37
      %p44 = scmp.eq.s32.totalorder %s16, 1
      %p45 = por %p43, %p44
      %p46 = scmp.ne.s32.totalorder %s38, %s41
      %p47 = scmp.eq.s32.totalorder %s16, 0
      %p48 = por %p46, %p47
      %p49 = scmp.ne.s32.totalorder %s38, %s41
      %p50 = scmp.eq.s32.totalorder %s21, 1
      %p51 = por %p49, %p50
      %p52 = scmp.ne.s32.totalorder %s41, %s42
      %p53 = scmp.eq.s32.totalorder %s21, 0
      %p54 = por %p52, %p53
      %p55 = scmp.ne.s32.totalorder %s41, %s42
      %p56 = scmp.eq.s32.totalorder %s22, 1
      %p57 = por %p55, %p56
      %p59 = scmp.ne.s32.totalorder %s42, %s58
      %p60 = scmp.eq.s32.totalorder %s22, 0
      %p61 = por %p59, %p60
      %s63 = sadd.s32 %s62, 1
      %p66 = scmp.eq.s32.totalorder %s16, 1
      %p67 = scmp.ne.s32.totalorder %s62, %s64
      %p68 = scmp.eq.s32.totalorder %s16, 0
      %p69 = por %p67, %p68
      %p70 = scmp.ne.s32.totalorder %s62, %s64
      %p71 = scmp.eq.s32.totalorder %s21, 1
      %p72 = por %p70, %p71
      %p73 = scmp.ne.s32.totalorder %s64, %s65
      %p74 = scmp.eq.s32.totalorder %s21, 0
      %p75 = por %p73, %p74
      %p76 = scmp.ne.s32.totalorder %s64, %s65
      %p77 = scmp.eq.s32.totalorder %s22, 1
      %p78 = por %p76, %p77
      %p80 = scmp.ne.s32.totalorder %s65, %s79
      %p81 = scmp.eq.s32.totalorder %s22, 0
      %p82 = por %p80, %p81
      %s84 = sadd.s32 %s83, 1
      %p87 = scmp.eq.s32.totalorder %s16, 1
      %p88 = scmp.ne.s32.totalorder %s83, %s85
      %p89 = scmp.eq.s32.totalorder %s16, 0
      %p90 = por %p88, %p89
      %p91 = scmp.ne.s32.totalorder %s83, %s85
      %p92 = scmp.eq.s32.totalorder %s21, 1
      %p93 = por %p91, %p92
      %p94 = scmp.ne.s32.totalorder %s85, %s86
      %p95 = scmp.eq.s32.totalorder %s21, 0
      %p96 = por %p94, %p95
      %p97 = scmp.ne.s32.totalorder %s85, %s86
      %p98 = scmp.eq.s32.totalorder %s22, 1
      %p99 = por %p97, %p98
      %p101 = scmp.ne.s32.totalorder %s86, %s100
      %p102 = scmp.eq.s32.totalorder %s22, 0
      %p103 = por %p101, %p102
      %s105 = sadd.s32 %s104, 1
      %p108 = scmp.eq.s32.totalorder %s16, 1
      %p109 = scmp.ne.s32.totalorder %s104, %s106
      %p110 = scmp.eq.s32.totalorder %s16, 0
      %p111 = por %p109, %p110
      %p112 = scmp.ne.s32.totalorder %s104, %s106
      %p113 = scmp.eq.s32.totalorder %s21, 1
      %p114 = por %p112, %p113
      %p115 = scmp.ne.s32.totalorder %s106, %s107
      %p116 = scmp.eq.s32.totalorder %s21, 0
      %p117 = por %p115, %p116
      %p118 = scmp.ne.s32.totalorder %s106, %s107
      %p119 = scmp.eq.s32.totalorder %s22, 1
      %p120 = por %p118, %p119
      %p122 = scmp.ne.s32.totalorder %s107, %s121
      %p123 = scmp.eq.s32.totalorder %s22, 0
      %p124 = por %p122, %p123
      %s126 = sadd.s32 %s125, 1
      %p129 = scmp.eq.s32.totalorder %s16, 1
      %p130 = scmp.ne.s32.totalorder %s125, %s127
      %p131 = scmp.eq.s32.totalorder %s16, 0
      %p132 = por %p130, %p131
      %p133 = scmp.ne.s32.totalorder %s125, %s127
      %p134 = scmp.eq.s32.totalorder %s21, 1
      %p135 = por %p133, %p134
      %p136 = scmp.ne.s32.totalorder %s127, %s128
      %p137 = scmp.eq.s32.totalorder %s21, 0
      %p138 = por %p136, %p137
      %p139 = scmp.ne.s32.totalorder %s127, %s128
      %p140 = scmp.eq.s32.totalorder %s22, 1
      %p141 = por %p139, %p140
      %p143 = scmp.ne.s32.totalorder %s128, %s142
      %p144 = scmp.eq.s32.totalorder %s22, 0
      %p145 = por %p143, %p144
      %s146 = ssub.s32 %s23, %s35
      %s147 = ssub.s32 %s24, %s31
      %s148 = sor.u32 %s146, %s147
      %p149 = scmp.eq.s32.totalorder %s148, 0
      %s151 = sadd.s32 %s150, 1
      %s152 = scalar_select %p149, %s150, %s151
      %p155 = pneg %p149
      %p156 = scmp.eq.s32.totalorder %s16, 1
      %p157 = por %p155, %p156
      %p158 = scmp.ne.s32.totalorder %s150, %s153
      %p159 = scmp.eq.s32.totalorder %s16, 0
      %p160 = por %p158, %p159
      %p161 = scmp.ne.s32.totalorder %s150, %s153
      %p162 = scmp.eq.s32.totalorder %s21, 1
      %p163 = por %p161, %p162
      %p164 = scmp.ne.s32.totalorder %s153, %s154
      %p165 = scmp.eq.s32.totalorder %s21, 0
      %p166 = por %p164, %p165
      %p167 = scmp.ne.s32.totalorder %s153, %s154
      %p168 = scmp.eq.s32.totalorder %s22, 1
      %p169 = por %p167, %p168
      %p171 = scmp.ne.s32.totalorder %s154, %s170
      %p172 = scmp.eq.s32.totalorder %s22, 0
      %p173 = por %p171, %p172
      %p174 = scmp.le.s32.totalorder 1, %s16
      %p175 = scmp.lt.s32.totalorder %s16, 3
      %p176 = pnand %p174, %p175
      %p177 = pneg %p176
      // Predicated region
      $region9: #{tpu_custom_call.1} parent=5 // pred_check
        _
      $region10: #{tpu_custom_call.1} parent=5 // pred_check_branch
        %179 = sbr.rel (%p176) target = $region12
      $region11: #{tpu_custom_call.1} parent=5 // pred_region
        %s180 = ssub.s32 %s16, 1
        // Predicated region
        $region13: #{tpu_custom_call.1} parent=11 // pred_check
          %p181 = pneg %p75
        $region14: #{tpu_custom_call.1} parent=11 // pred_check_branch
          %183 = sbr.rel (%p181) target = $region16
        $region15: #{tpu_custom_call.1} parent=11 // pred_region
          %185 = vsyncadd [#allocation5], 0
          %s186 = sshll.u32 %s1, 4
          %s187 = int_to_ptr.hbm [resolvable:$true] %s186
          %s188 = sshll.u32 [#allocation4], 4
          %s189 = int_to_ptr.vmem [resolvable:$true] %s188
          %194 = dma.hbm_to_vmem [thread:$0]  %s187, 256, %s189, [#allocation5], 64, 64, 4
        $region16: #{tpu_custom_call.1} parent=11 // pred_fallthru
          _
        // Predicated region
        $region17: #{tpu_custom_call.1} parent=11 // pred_check
          %p195 = pneg %p96
        $region18: #{tpu_custom_call.1} parent=11 // pred_check_branch
          %197 = sbr.rel (%p195) target = $region20
        $region19: #{tpu_custom_call.1} parent=11 // pred_region
          _
        $region20: #{tpu_custom_call.1} parent=11 // pred_fallthru
          _
        // Predicated region
        $region21: #{tpu_custom_call.1} parent=11 // pred_check
          %p198 = pneg %p117
        $region22: #{tpu_custom_call.1} parent=11 // pred_check_branch
          %200 = sbr.rel (%p198) target = $region24
        $region23: #{tpu_custom_call.1} parent=11 // pred_region
          %202 = vsyncadd [#allocation8], 0
          %s203 = sshll.u32 %s3, 4
          %s204 = int_to_ptr.hbm [resolvable:$true] %s203
          %s205 = sshll.u32 [#allocation7], 4
          %s206 = int_to_ptr.vmem [resolvable:$true] %s205
          %211 = dma.hbm_to_vmem [thread:$0]  %s204, 256, %s206, [#allocation8], 64, 64, 4
        $region24: #{tpu_custom_call.1} parent=11 // pred_fallthru
          _
        // Predicated region
        $region25: #{tpu_custom_call.1} parent=11 // pred_check
          %p212 = pneg %p138
        $region26: #{tpu_custom_call.1} parent=11 // pred_check_branch
          %214 = sbr.rel (%p212) target = $region28
        $region27: #{tpu_custom_call.1} parent=11 // pred_region
          _
        $region28: #{tpu_custom_call.1} parent=11 // pred_fallthru
          _
      $region12: #{tpu_custom_call.1} parent=5 // pred_fallthru
        _
      %p215 = scmp.lt.s32.totalorder %s16, 2
      // Predicated region
      $region29: #{tpu_custom_call.1} parent=5 // pred_check
        %p216 = pneg %p215
      $region30: #{tpu_custom_call.1} parent=5 // pred_check_branch
        %218 = sbr.rel (%p216) target = $region32
      $region31: #{tpu_custom_call.1} parent=5 // pred_region
        // Predicated region
        $region33: #{tpu_custom_call.1} parent=31 // pred_check
          %p219 = pneg %p48
        $region34: #{tpu_custom_call.1} parent=31 // pred_check_branch
          %221 = sbr.rel (%p219) target = $region36
        $region35: #{tpu_custom_call.1} parent=31 // pred_region
          %p222 = scmp.lt.s32.totalorder %s23, 1
          %s223 = scalar_select %p222, %s23, 1
          %s224 = smul.addr %s223, 8
          %s225 = smul.addr %s224, 4
          %s226 = scalar_lea.vmem %s0, %s225
        $region36: #{tpu_custom_call.1} parent=31 // pred_fallthru
          _
      $region32: #{tpu_custom_call.1} parent=5 // pred_fallthru
        _
      %p227 = scmp.le.s32.totalorder 1, %s16
      %p228 = scmp.lt.s32.totalorder %s16, 3
      %p229 = pnand %p227, %p228
      %p230 = pneg %p229
      // Predicated region
      $region37: #{tpu_custom_call.1} parent=5 // pred_check
        _
      $region38: #{tpu_custom_call.1} parent=5 // pred_check_branch
        %232 = sbr.rel (%p229) target = $region40
      $region39: #{tpu_custom_call.1} parent=5 // pred_region
        %s233 = ssub.s32 %s16, 1
        // Predicated region
        $region41: #{tpu_custom_call.1} parent=39 // pred_check
          %p234 = pneg %p75
        $region42: #{tpu_custom_call.1} parent=39 // pred_check_branch
          %236 = sbr.rel (%p234) target = $region44
        $region43: #{tpu_custom_call.1} parent=39 // pred_region
          %238 = dma.done [#allocation5], 256
        $region44: #{tpu_custom_call.1} parent=39 // pred_fallthru
          _
        // Predicated region
        $region45: #{tpu_custom_call.1} parent=39 // pred_check
          %p239 = pneg %p117
        $region46: #{tpu_custom_call.1} parent=39 // pred_check_branch
          %241 = sbr.rel (%p239) target = $region48
        $region47: #{tpu_custom_call.1} parent=39 // pred_region
          %243 = dma.done [#allocation8], 256
        $region48: #{tpu_custom_call.1} parent=39 // pred_fallthru
          _
        %p244 = scmp.lt.s32.totalorder %s25, 1
        %s245 = scalar_select %p244, %s25, 1
        %s246 = smul.addr %s245, 8
        %s247 = smul.addr %s246, 4
        %s248 = scalar_lea.vmem %s0, %s247
        %p249 = pneg %p54
        %p250 = pneg %p51
        %p251 = pneg %p75
        %p252 = pneg %p72
        %p253 = pneg %p96
        %p254 = pneg %p93
        %p255 = pneg %p117
        %p256 = pneg %p114
        %p257 = pneg %p138
        %p258 = pneg %p135
        %p259 = pneg %p166
        %p260 = pneg %p163
        %s261 = sand.u32 %s153, 1
        %s262 = scalar_lea.sflag [#allocation6], %s261
        %s263 = sand.u32 %s153, 1
        %s264 = smul.addr %s263, 64
        %s265 = scalar_lea.vmem [#allocation9], %s264
        %p266 = scmp.lt.s32.totalorder %s25, 1
        %s267 = scalar_select %p266, %s25, 1
        %s268 = smul.addr %s267, 8
        %s269 = smul.addr %s268, 4
        %s270 = scalar_lea.vmem %s0, %s269
        %s271 = smul.u32 2, %s26
        %p273 = scmp.eq.s32.totalorder %s26, 0
        // Predicated region
        $region49: #{tpu_custom_call.1} parent=39 // pred_check
          %p274 = pneg %p273
        $region50: #{tpu_custom_call.1} parent=39 // pred_check_branch
          %276 = sbr.rel (%p274) target = $region52
        $region51: #{tpu_custom_call.1} parent=39 // pred_region
          %v277 = vld [vmem:[%s270] sm:$0xff]
          %v278 = vld [vmem:[%s270 + $0x8] sm:$0xff]
          %v279 = vld [vmem:[%s270 + $0x10] sm:$0xff]
          %v280 = vld [vmem:[%s270 + $0x18] sm:$0xff]
          %v285 = vunpack.c.l.b16 %v277
          %v286 = vunpack.c.h.b16 %v277
          %v287 = vunpack.c.l.b16 %v278
          %v288 = vunpack.c.h.b16 %v278
          %v289 = vunpack.c.l.b16 %v279
          %v290 = vunpack.c.h.b16 %v279
          %v291 = vunpack.c.l.b16 %v280
          %v292 = vunpack.c.h.b16 %v280
          %v293 = vpack.c.b16 %v287, %v285
          %v294 = vpack.c.b16 %v288, %v286
          %v295 = vpack.c.b16 %v291, %v289
          %v296 = vpack.c.b16 %v292, %v290
          %301 = vxpose.binary.xlu0.c.b16.start [1/16] %v294, %v293, 128
          %302 = vxpose.binary.xlu0.c.b16.cont [2/16] %v296, %v295, 128
          %303 = vxpose.binary.xlu0.c.b16.cont [3/16] 0, 0, 128
          %304 = vxpose.binary.xlu0.c.b16.cont [4/16] 0, 0, 128
          %305 = vxpose.binary.xlu0.c.b16.cont [5/16] 0, 0, 128
          %306 = vxpose.binary.xlu0.c.b16.cont [6/16] 0, 0, 128
          %307 = vxpose.binary.xlu0.c.b16.cont [7/16] 0, 0, 128
          %308 = vxpose.binary.xlu0.c.b16.end [8/16] 0, 0, 128
          %v309 = vpop.trf.xlu0
          %v310 = vpop.trf.xlu0
          %v311 = vpop.trf.xlu0
          %v312 = vpop.trf.xlu0
          %v313 = vpop.trf.xlu0
          %v314 = vpop.trf.xlu0
          %v315 = vpop.trf.xlu0
          %v316 = vpop.trf.xlu0
          %v317 = vpop.trf.xlu0
          %v318 = vpop.trf.xlu0
          %v319 = vpop.trf.xlu0
          %v320 = vpop.trf.xlu0
          %v321 = vpop.trf.xlu0
          %v322 = vpop.trf.xlu0
          %v323 = vpop.trf.xlu0
          %v324 = vpop.trf.xlu0
          %v341 = vunpack.c.l.b16 %v309
          %v342 = vunpack.c.h.b16 %v309
          %v343 = vunpack.c.l.b16 %v311
          %v344 = vunpack.c.h.b16 %v311
          %v345 = vunpack.c.l.b16 %v313
          %v346 = vunpack.c.h.b16 %v313
          %v347 = vunpack.c.l.b16 %v315
          %v348 = vunpack.c.h.b16 %v315
          %v349 = vunpack.c.l.b16 %v317
          %v350 = vunpack.c.h.b16 %v317
          %v351 = vunpack.c.l.b16 %v319
          %v352 = vunpack.c.h.b16 %v319
          %v353 = vunpack.c.l.b16 %v321
          %v354 = vunpack.c.h.b16 %v321
          %v355 = vunpack.c.l.b16 %v323
          %v356 = vunpack.c.h.b16 %v323
          %v357 = vunpack.c.l.b16 %v310
          %v358 = vunpack.c.h.b16 %v310
          %v359 = vunpack.c.l.b16 %v312
          %v360 = vunpack.c.h.b16 %v312
          %v361 = vunpack.c.l.b16 %v314
          %v362 = vunpack.c.h.b16 %v314
          %v363 = vunpack.c.l.b16 %v316
          %v364 = vunpack.c.h.b16 %v316
          %v365 = vunpack.c.l.b16 %v318
          %v366 = vunpack.c.h.b16 %v318
          %v367 = vunpack.c.l.b16 %v320
          %v368 = vunpack.c.h.b16 %v320
          %v369 = vunpack.c.l.b16 %v322
          %v370 = vunpack.c.h.b16 %v322
          %v371 = vunpack.c.l.b16 %v324
          %v372 = vunpack.c.h.b16 %v324
          %v373 = vpack.c.b16 %v341, %v341
          %v374 = vpack.c.b16 %v342, %v342
          %v375 = vpack.c.b16 %v343, %v343
          %v376 = vpack.c.b16 %v344, %v344
          %v377 = vpack.c.b16 %v345, %v345
          %v378 = vpack.c.b16 %v346, %v346
          %v379 = vpack.c.b16 %v347, %v347
          %v380 = vpack.c.b16 %v348, %v348
          %v381 = vpack.c.b16 %v349, %v349
          %v382 = vpack.c.b16 %v350, %v350
          %v383 = vpack.c.b16 %v351, %v351
          %v384 = vpack.c.b16 %v352, %v352
          %v385 = vpack.c.b16 %v353, %v353
          %v386 = vpack.c.b16 %v354, %v354
          %v387 = vpack.c.b16 %v355, %v355
          %v388 = vpack.c.b16 %v356, %v356
          %v389 = vpack.c.b16 %v357, %v357
          %v390 = vpack.c.b16 %v358, %v358
          %v391 = vpack.c.b16 %v359, %v359
          %v392 = vpack.c.b16 %v360, %v360
          %v393 = vpack.c.b16 %v361, %v361
          %v394 = vpack.c.b16 %v362, %v362
          %v395 = vpack.c.b16 %v363, %v363
          %v396 = vpack.c.b16 %v364, %v364
          %v397 = vpack.c.b16 %v365, %v365
          %v398 = vpack.c.b16 %v366, %v366
          %v399 = vpack.c.b16 %v367, %v367
          %v400 = vpack.c.b16 %v368, %v368
          %v401 = vpack.c.b16 %v369, %v369
          %v402 = vpack.c.b16 %v370, %v370
          %v403 = vpack.c.b16 %v371, %v371
          %v404 = vpack.c.b16 %v372, %v372
          %vm437 = vcmask 257024
          %438 = vst.msk [vmem:[#allocation2] sm:$0xf] %vm437, %v373
          %439 = vst.msk [vmem:[#allocation2 + $0x4] sm:$0xf] %vm437, %v374
          %440 = vst.msk [vmem:[#allocation2 + $0x8] sm:$0xf] %vm437, %v375
          %441 = vst.msk [vmem:[#allocation2 + $0xc] sm:$0xf] %vm437, %v376
          %442 = vst.msk [vmem:[#allocation2 + $0x10] sm:$0xf] %vm437, %v377
          %443 = vst.msk [vmem:[#allocation2 + $0x14] sm:$0xf] %vm437, %v378
          %444 = vst.msk [vmem:[#allocation2 + $0x18] sm:$0xf] %vm437, %v379
          %445 = vst.msk [vmem:[#allocation2 + $0x1c] sm:$0xf] %vm437, %v380
          %446 = vst.msk [vmem:[#allocation2 + $0x20] sm:$0xf] %vm437, %v381
          %447 = vst.msk [vmem:[#allocation2 + $0x24] sm:$0xf] %vm437, %v382
          %448 = vst.msk [vmem:[#allocation2 + $0x28] sm:$0xf] %vm437, %v383
          %449 = vst.msk [vmem:[#allocation2 + $0x2c] sm:$0xf] %vm437, %v384
          %450 = vst.msk [vmem:[#allocation2 + $0x30] sm:$0xf] %vm437, %v385
          %451 = vst.msk [vmem:[#allocation2 + $0x34] sm:$0xf] %vm437, %v386
          %452 = vst.msk [vmem:[#allocation2 + $0x38] sm:$0xf] %vm437, %v387
          %453 = vst.msk [vmem:[#allocation2 + $0x3c] sm:$0xf] %vm437, %v388
          %454 = vst.msk [vmem:[#allocation2 + $0x40] sm:$0xf] %vm437, %v389
          %455 = vst.msk [vmem:[#allocation2 + $0x44] sm:$0xf] %vm437, %v390
          %456 = vst.msk [vmem:[#allocation2 + $0x48] sm:$0xf] %vm437, %v391
          %457 = vst.msk [vmem:[#allocation2 + $0x4c] sm:$0xf] %vm437, %v392
          %458 = vst.msk [vmem:[#allocation2 + $0x50] sm:$0xf] %vm437, %v393
          %459 = vst.msk [vmem:[#allocation2 + $0x54] sm:$0xf] %vm437, %v394
          %460 = vst.msk [vmem:[#allocation2 + $0x58] sm:$0xf] %vm437, %v395
          %461 = vst.msk [vmem:[#allocation2 + $0x5c] sm:$0xf] %vm437, %v396
          %462 = vst.msk [vmem:[#allocation2 + $0x60] sm:$0xf] %vm437, %v397
          %463 = vst.msk [vmem:[#allocation2 + $0x64] sm:$0xf] %vm437, %v398
          %464 = vst.msk [vmem:[#allocation2 + $0x68] sm:$0xf] %vm437, %v399
          %465 = vst.msk [vmem:[#allocation2 + $0x6c] sm:$0xf] %vm437, %v400
          %466 = vst.msk [vmem:[#allocation2 + $0x70] sm:$0xf] %vm437, %v401
          %467 = vst.msk [vmem:[#allocation2 + $0x74] sm:$0xf] %vm437, %v402
          %468 = vst.msk [vmem:[#allocation2 + $0x78] sm:$0xf] %vm437, %v403
          %469 = vst.msk [vmem:[#allocation2 + $0x7c] sm:$0xf] %vm437, %v404
          %v470 = vld [vmem:[#allocation7] sm:$0xf]
          %v471 = vld [vmem:[#allocation7 + $0x4] sm:$0xf]
          %v472 = vld [vmem:[#allocation7 + $0x8] sm:$0xf]
          %v473 = vld [vmem:[#allocation7 + $0xc] sm:$0xf]
          %v474 = vld [vmem:[%s4] sm:$0xff]
          %v475 = vld [vmem:[%s4 + $0x8] sm:$0xff]
          %v476 = vld [vmem:[%s4 + $0x10] sm:$0xff]
          %v477 = vld [vmem:[%s4 + $0x18] sm:$0xff]
          %479 = vset.pattern.permute.xlu0 0
          %480 = vperm.xlu0 %479, %v474
          %v481 = vpop.permute.xlu0 %480
          %484 = vset.pattern.permute.xlu0 0
          %485 = vperm.xlu0 %484, %v475
          %v486 = vpop.permute.xlu0 %485
          %489 = vset.pattern.permute.xlu0 0
          %490 = vperm.xlu0 %489, %v476
          %v491 = vpop.permute.xlu0 %490
          %494 = vset.pattern.permute.xlu0 0
          %495 = vperm.xlu0 %494, %v477
          %v496 = vpop.permute.xlu0 %495
          %v502 = vunpack.c.l.b16 %v470
          %v503 = vunpack.c.l.b16 %v471
          %v504 = vunpack.c.l.b16 %v472
          %v505 = vunpack.c.l.b16 %v473
          %v506 = vpack.c.b16 %v503, %v502
          %v507 = vpack.c.b16 %v505, %v504
          %vm508 = vcmask 261120
          %v510 = vsel %vm508, %v506, 0
          %v513 = vsel %vm508, %v507, 0
          %515 = vmatpush.bf16.msra.mxu0 0
          %516 = vmatpush.bf16.msra.mxu0 0
          %517 = vmatpush.bf16.msra.mxu0 0
          %518 = vmatpush.bf16.msra.mxu0 0
          %519 = vmatpush.bf16.msra.mxu0 0
          %520 = vmatpush.bf16.msra.mxu0 0
          %521 = vmatpush.bf16.msra.mxu0 %v295
          %522 = vmatpush.bf16.msra.mxu0 %v293
          %523 = vmatmul.bf16.gmra.mxu0 %v510
          %v524 = vpop.f32.mrf.mxu0
          %v525 = vadd.f32 %v481, %v524
          %v526 = vpop.f32.mrf.mxu0
          %v527 = vadd.f32 %v486, %v526
          %528 = vmatmul.bf16.gmra.mxu0 %v513
          %v529 = vpop.f32.mrf.mxu0
          %v530 = vadd.f32 %v491, %v529
          %v531 = vpop.f32.mrf.mxu0
          %v532 = vadd.f32 %v496, %v531
          %533 = vdwg.mxu0
          %534 = vmatpush.bf16.msra.mxu0 0
          %535 = vmatpush.bf16.msra.mxu0 0
          %536 = vmatpush.bf16.msra.mxu0 0
          %537 = vmatpush.bf16.msra.mxu0 0
          %538 = vmatpush.bf16.msra.mxu0 0
          %539 = vmatpush.bf16.msra.mxu0 0
          %540 = vmatpush.bf16.msra.mxu0 %v296
          %541 = vmatpush.bf16.msra.mxu0 %v294
          %542 = vmatmul.bf16.gmra.mxu0 %v510
          %v543 = vpop.f32.mrf.mxu0
          %v544 = vadd.f32 %v481, %v543
          %v545 = vpop.f32.mrf.mxu0
          %v546 = vadd.f32 %v486, %v545
          %547 = vmatmul.bf16.gmra.mxu0 %v513
          %v548 = vpop.f32.mrf.mxu0
          %v549 = vadd.f32 %v491, %v548
          %v550 = vpop.f32.mrf.mxu0
          %v551 = vadd.f32 %v496, %v550
          %552 = vdwg.mxu0
          %v553 = vpack.c.bf16 %v544, %v525
          %v554 = vpack.c.bf16 %v546, %v527
          %v555 = vpack.c.bf16 %v549, %v530
          %v556 = vpack.c.bf16 %v551, %v532
          %557 = vst [vmem:[#allocation3] sm:$0xff] %v553
          %558 = vst [vmem:[#allocation3 + $0x8] sm:$0xff] %v554
          %559 = vst [vmem:[#allocation3 + $0x10] sm:$0xff] %v555
          %560 = vst [vmem:[#allocation3 + $0x18] sm:$0xff] %v556
        $region52: #{tpu_custom_call.1} parent=39 // pred_fallthru
          _
        %s561 = smul.u32 %s26, 256
        %s562 = sshra.s32 %s561, 7
        %s563 = sand.u32 %s561, 127
        %s564 = smul.addr %s562, 4
        %s565 = scalar_lea.vmem %s270, %s564
        %v566 = vld [vmem:[%s565] sm:$0xff]
        %v567 = vld [vmem:[%s565 + $0x8] sm:$0xff]
        %v568 = vld [vmem:[%s565 + $0x10] sm:$0xff]
        %v569 = vld [vmem:[%s565 + $0x18] sm:$0xff]
        %v570 = vld [vmem:[#allocation4] sm:$0xf]
        %v571 = vld [vmem:[#allocation4 + $0x4] sm:$0xf]
        %v572 = vld [vmem:[#allocation4 + $0x8] sm:$0xf]
        %v573 = vld [vmem:[#allocation4 + $0xc] sm:$0xf]
        %v574 = vld [vmem:[%s2] sm:$0xff]
        %v575 = vld [vmem:[%s2 + $0x8] sm:$0xff]
        %v576 = vld [vmem:[%s2 + $0x10] sm:$0xff]
        %v577 = vld [vmem:[%s2 + $0x18] sm:$0xff]
        %579 = vset.pattern.permute.xlu0 0
        %580 = vperm.xlu0 %579, %v574
        %v581 = vpop.permute.xlu0 %580
        %584 = vset.pattern.permute.xlu0 0
        %585 = vperm.xlu0 %584, %v575
        %v586 = vpop.permute.xlu0 %585
        %589 = vset.pattern.permute.xlu0 0
        %590 = vperm.xlu0 %589, %v576
        %v591 = vpop.permute.xlu0 %590
        %594 = vset.pattern.permute.xlu0 0
        %595 = vperm.xlu0 %594, %v577
        %v596 = vpop.permute.xlu0 %595
        %v602 = vunpack.c.l.b16 %v570
        %v603 = vunpack.c.l.b16 %v571
        %v604 = vunpack.c.l.b16 %v572
        %v605 = vunpack.c.l.b16 %v573
        %v606 = vpack.c.b16 %v603, %v602
        %v607 = vpack.c.b16 %v605, %v604
        %v612 = vunpack.c.l.b16 %v566
        %v613 = vunpack.c.h.b16 %v566
        %v614 = vunpack.c.l.b16 %v567
        %v615 = vunpack.c.h.b16 %v567
        %v616 = vunpack.c.l.b16 %v568
        %v617 = vunpack.c.h.b16 %v568
        %v618 = vunpack.c.l.b16 %v569
        %v619 = vunpack.c.h.b16 %v569
        %v620 = vpack.c.b16 %v614, %v612
        %v621 = vpack.c.b16 %v615, %v613
        %v622 = vpack.c.b16 %v618, %v616
        %v623 = vpack.c.b16 %v619, %v617
        %vm628 = vcmask 261120
        %v630 = vsel %vm628, %v606, 0
        %v633 = vsel %vm628, %v607, 0
        %635 = vmatpush.bf16.msra.mxu0 0
        %636 = vmatpush.bf16.msra.mxu0 0
        %637 = vmatpush.bf16.msra.mxu0 0
        %638 = vmatpush.bf16.msra.mxu0 0
        %639 = vmatpush.bf16.msra.mxu0 0
        %640 = vmatpush.bf16.msra.mxu0 0
        %641 = vmatpush.bf16.msra.mxu0 %v622
        %642 = vmatpush.bf16.msra.mxu0 %v620
        %643 = vmatmul.bf16.gmra.mxu0 %v630
        %v644 = vpop.f32.mrf.mxu0
        %v645 = vadd.f32 %v581, %v644
        %v646 = vpop.f32.mrf.mxu0
        %v647 = vadd.f32 %v586, %v646
        %648 = vmatmul.bf16.gmra.mxu0 %v633
        %v649 = vpop.f32.mrf.mxu0
        %v650 = vadd.f32 %v591, %v649
        %v651 = vpop.f32.mrf.mxu0
        %v652 = vadd.f32 %v596, %v651
        %653 = vdwg.mxu0
        %654 = vmatpush.bf16.msra.mxu0 0
        %655 = vmatpush.bf16.msra.mxu0 0
        %656 = vmatpush.bf16.msra.mxu0 0
        %657 = vmatpush.bf16.msra.mxu0 0
        %658 = vmatpush.bf16.msra.mxu0 0
        %659 = vmatpush.bf16.msra.mxu0 0
        %660 = vmatpush.bf16.msra.mxu0 %v623
        %661 = vmatpush.bf16.msra.mxu0 %v621
        %662 = vmatmul.bf16.gmra.mxu0 %v630
        %v663 = vpop.f32.mrf.mxu0
        %v664 = vadd.f32 %v581, %v663
        %v665 = vpop.f32.mrf.mxu0
        %v666 = vadd.f32 %v586, %v665
        %667 = vmatmul.bf16.gmra.mxu0 %v633
        %v668 = vpop.f32.mrf.mxu0
        %v669 = vadd.f32 %v591, %v668
        %v670 = vpop.f32.mrf.mxu0
        %v671 = vadd.f32 %v596, %v670
        %672 = vdwg.mxu0
        %v673 = vld [vmem:[#allocation2] sm:$0xf]
        %v674 = vld [vmem:[#allocation2 + $0x4] sm:$0xf]
        %v675 = vld [vmem:[#allocation2 + $0x8] sm:$0xf]
        %v676 = vld [vmem:[#allocation2 + $0xc] sm:$0xf]
        %v677 = vld [vmem:[#allocation2 + $0x10] sm:$0xf]
        %v678 = vld [vmem:[#allocation2 + $0x14] sm:$0xf]
        %v679 = vld [vmem:[#allocation2 + $0x18] sm:$0xf]
        %v680 = vld [vmem:[#allocation2 + $0x1c] sm:$0xf]
        %v681 = vld [vmem:[#allocation2 + $0x20] sm:$0xf]
        %v682 = vld [vmem:[#allocation2 + $0x24] sm:$0xf]
        %v683 = vld [vmem:[#allocation2 + $0x28] sm:$0xf]
        %v684 = vld [vmem:[#allocation2 + $0x2c] sm:$0xf]
        %v685 = vld [vmem:[#allocation2 + $0x30] sm:$0xf]
        %v686 = vld [vmem:[#allocation2 + $0x34] sm:$0xf]
        %v687 = vld [vmem:[#allocation2 + $0x38] sm:$0xf]
        %v688 = vld [vmem:[#allocation2 + $0x3c] sm:$0xf]
        %v689 = vld [vmem:[#allocation2 + $0x40] sm:$0xf]
        %v690 = vld [vmem:[#allocation2 + $0x44] sm:$0xf]
        %v691 = vld [vmem:[#allocation2 + $0x48] sm:$0xf]
        %v692 = vld [vmem:[#allocation2 + $0x4c] sm:$0xf]
        %v693 = vld [vmem:[#allocation2 + $0x50] sm:$0xf]
        %v694 = vld [vmem:[#allocation2 + $0x54] sm:$0xf]
        %v695 = vld [vmem:[#allocation2 + $0x58] sm:$0xf]
        %v696 = vld [vmem:[#allocation2 + $0x5c] sm:$0xf]
        %v697 = vld [vmem:[#allocation2 + $0x60] sm:$0xf]
        %v698 = vld [vmem:[#allocation2 + $0x64] sm:$0xf]
        %v699 = vld [vmem:[#allocation2 + $0x68] sm:$0xf]
        %v700 = vld [vmem:[#allocation2 + $0x6c] sm:$0xf]
        %v701 = vld [vmem:[#allocation2 + $0x70] sm:$0xf]
        %v702 = vld [vmem:[#allocation2 + $0x74] sm:$0xf]
        %v703 = vld [vmem:[#allocation2 + $0x78] sm:$0xf]
        %v704 = vld [vmem:[#allocation2 + $0x7c] sm:$0xf]
        %v705 = vpack.c.bf16 %v647, %v645
        %v706 = vpack.c.bf16 %v666, %v664
        %v707 = vpack.c.bf16 %v652, %v650
        %v708 = vpack.c.bf16 %v671, %v669
        %v741 = vunpack.c.l.b16 %v673
        %v742 = vunpack.c.l.b16 %v674
        %v743 = vunpack.c.l.b16 %v675
        %v744 = vunpack.c.l.b16 %v676
        %v745 = vunpack.c.l.b16 %v677
        %v746 = vunpack.c.l.b16 %v678
        %v747 = vunpack.c.l.b16 %v679
        %v748 = vunpack.c.l.b16 %v680
        %v749 = vunpack.c.l.b16 %v681
        %v750 = vunpack.c.l.b16 %v682
        %v751 = vunpack.c.l.b16 %v683
        %v752 = vunpack.c.l.b16 %v684
        %v753 = vunpack.c.l.b16 %v685
        %v754 = vunpack.c.l.b16 %v686
        %v755 = vunpack.c.l.b16 %v687
        %v756 = vunpack.c.l.b16 %v688
        %v757 = vunpack.c.l.b16 %v689
        %v758 = vunpack.c.l.b16 %v690
        %v759 = vunpack.c.l.b16 %v691
        %v760 = vunpack.c.l.b16 %v692
        %v761 = vunpack.c.l.b16 %v693
        %v762 = vunpack.c.l.b16 %v694
        %v763 = vunpack.c.l.b16 %v695
        %v764 = vunpack.c.l.b16 %v696
        %v765 = vunpack.c.l.b16 %v697
        %v766 = vunpack.c.l.b16 %v698
        %v767 = vunpack.c.l.b16 %v699
        %v768 = vunpack.c.l.b16 %v700
        %v769 = vunpack.c.l.b16 %v701
        %v770 = vunpack.c.l.b16 %v702
        %v771 = vunpack.c.l.b16 %v703
        %v772 = vunpack.c.l.b16 %v704
        %v773 = vpack.c.b16 %v742, %v741
        %v774 = vpack.c.b16 %v744, %v743
        %v775 = vpack.c.b16 %v746, %v745
        %v776 = vpack.c.b16 %v748, %v747
        %v777 = vpack.c.b16 %v750, %v749
        %v778 = vpack.c.b16 %v752, %v751
        %v779 = vpack.c.b16 %v754, %v753
        %v780 = vpack.c.b16 %v756, %v755
        %v781 = vpack.c.b16 %v758, %v757
        %v782 = vpack.c.b16 %v760, %v759
        %v783 = vpack.c.b16 %v762, %v761
        %v784 = vpack.c.b16 %v764, %v763
        %v785 = vpack.c.b16 %v766, %v765
        %v786 = vpack.c.b16 %v768, %v767
        %v787 = vpack.c.b16 %v770, %v769
        %v788 = vpack.c.b16 %v772, %v771
        %v790 = vsel %vm628, %v773, 0
        %v793 = vsel %vm628, %v774, 0
        %v796 = vsel %vm628, %v775, 0
        %v799 = vsel %vm628, %v776, 0
        %v802 = vsel %vm628, %v777, 0
        %v805 = vsel %vm628, %v778, 0
        %v808 = vsel %vm628, %v779, 0
        %v811 = vsel %vm628, %v780, 0
        %v814 = vsel %vm628, %v781, 0
        %v817 = vsel %vm628, %v782, 0
        %v820 = vsel %vm628, %v783, 0
        %v823 = vsel %vm628, %v784, 0
        %v826 = vsel %vm628, %v785, 0
        %v829 = vsel %vm628, %v786, 0
        %v832 = vsel %vm628, %v787, 0
        %v835 = vsel %vm628, %v788, 0
        %837 = vmatpush.bf16.msra.mxu0 0
        %838 = vmatpush.bf16.msra.mxu0 0
        %839 = vmatpush.bf16.msra.mxu0 0
        %840 = vmatpush.bf16.msra.mxu0 0
        %841 = vmatpush.bf16.msra.mxu0 0
        %842 = vmatpush.bf16.msra.mxu0 0
        %843 = vmatpush.bf16.msra.mxu0 %v707
        %844 = vmatpush.bf16.msra.mxu0 %v705
        %845 = vmatmul.bf16.gmra.mxu0 %v790
        %v846 = vpop.f32.mrf.mxu0
        %v847 = vadd.f32 0.0, %v846
        %v848 = vpop.f32.mrf.mxu0
        %v849 = vadd.f32 0.0, %v848
        %850 = vmatmul.bf16.gmra.mxu0 %v793
        %v851 = vpop.f32.mrf.mxu0
        %v852 = vadd.f32 0.0, %v851
        %v853 = vpop.f32.mrf.mxu0
        %v854 = vadd.f32 0.0, %v853
        %855 = vmatmul.bf16.gmra.mxu0 %v796
        %v856 = vpop.f32.mrf.mxu0
        %v857 = vadd.f32 0.0, %v856
        %v858 = vpop.f32.mrf.mxu0
        %v859 = vadd.f32 0.0, %v858
        %860 = vmatmul.bf16.gmra.mxu0 %v799
        %v861 = vpop.f32.mrf.mxu0
        %v862 = vadd.f32 0.0, %v861
        %v863 = vpop.f32.mrf.mxu0
        %v864 = vadd.f32 0.0, %v863
        %865 = vmatmul.bf16.gmra.mxu0 %v802
        %v866 = vpop.f32.mrf.mxu0
        %v867 = vadd.f32 0.0, %v866
        %v868 = vpop.f32.mrf.mxu0
        %v869 = vadd.f32 0.0, %v868
        %870 = vmatmul.bf16.gmra.mxu0 %v805
        %v871 = vpop.f32.mrf.mxu0
        %v872 = vadd.f32 0.0, %v871
        %v873 = vpop.f32.mrf.mxu0
        %v874 = vadd.f32 0.0, %v873
        %875 = vmatmul.bf16.gmra.mxu0 %v808
        %v876 = vpop.f32.mrf.mxu0
        %v877 = vadd.f32 0.0, %v876
        %v878 = vpop.f32.mrf.mxu0
        %v879 = vadd.f32 0.0, %v878
        %880 = vmatmul.bf16.gmra.mxu0 %v811
        %v881 = vpop.f32.mrf.mxu0
        %v882 = vadd.f32 0.0, %v881
        %v883 = vpop.f32.mrf.mxu0
        %v884 = vadd.f32 0.0, %v883
        %885 = vmatmul.bf16.gmra.mxu0 %v814
        %v886 = vpop.f32.mrf.mxu0
        %v887 = vadd.f32 0.0, %v886
        %v888 = vpop.f32.mrf.mxu0
        %v889 = vadd.f32 0.0, %v888
        %890 = vmatmul.bf16.gmra.mxu0 %v817
        %v891 = vpop.f32.mrf.mxu0
        %v892 = vadd.f32 0.0, %v891
        %v893 = vpop.f32.mrf.mxu0
        %v894 = vadd.f32 0.0, %v893
        %895 = vmatmul.bf16.gmra.mxu0 %v820
        %v896 = vpop.f32.mrf.mxu0
        %v897 = vadd.f32 0.0, %v896
        %v898 = vpop.f32.mrf.mxu0
        %v899 = vadd.f32 0.0, %v898
        %900 = vmatmul.bf16.gmra.mxu0 %v823
        %v901 = vpop.f32.mrf.mxu0
        %v902 = vadd.f32 0.0, %v901
        %v903 = vpop.f32.mrf.mxu0
        %v904 = vadd.f32 0.0, %v903
        %905 = vmatmul.bf16.gmra.mxu0 %v826
        %v906 = vpop.f32.mrf.mxu0
        %v907 = vadd.f32 0.0, %v906
        %v908 = vpop.f32.mrf.mxu0
        %v909 = vadd.f32 0.0, %v908
        %910 = vmatmul.bf16.gmra.mxu0 %v829
        %v911 = vpop.f32.mrf.mxu0
        %v912 = vadd.f32 0.0, %v911
        %v913 = vpop.f32.mrf.mxu0
        %v914 = vadd.f32 0.0, %v913
        %915 = vmatmul.bf16.gmra.mxu0 %v832
        %v916 = vpop.f32.mrf.mxu0
        %v917 = vadd.f32 0.0, %v916
        %v918 = vpop.f32.mrf.mxu0
        %v919 = vadd.f32 0.0, %v918
        %920 = vmatmul.bf16.gmra.mxu0 %v835
        %v921 = vpop.f32.mrf.mxu0
        %v922 = vadd.f32 0.0, %v921
        %v923 = vpop.f32.mrf.mxu0
        %v924 = vadd.f32 0.0, %v923
        %925 = vdwg.mxu0
        %926 = vmatpush.bf16.msra.mxu0 0
        %927 = vmatpush.bf16.msra.mxu0 0
        %928 = vmatpush.bf16.msra.mxu0 0
        %929 = vmatpush.bf16.msra.mxu0 0
        %930 = vmatpush.bf16.msra.mxu0 0
        %931 = vmatpush.bf16.msra.mxu0 0
        %932 = vmatpush.bf16.msra.mxu0 %v708
        %933 = vmatpush.bf16.msra.mxu0 %v706
        %934 = vmatmul.bf16.gmra.mxu0 %v790
        %v935 = vpop.f32.mrf.mxu0
        %v936 = vadd.f32 0.0, %v935
        %v937 = vpop.f32.mrf.mxu0
        %v938 = vadd.f32 0.0, %v937
        %939 = vmatmul.bf16.gmra.mxu0 %v793
        %v940 = vpop.f32.mrf.mxu0
        %v941 = vadd.f32 0.0, %v940
        %v942 = vpop.f32.mrf.mxu0
        %v943 = vadd.f32 0.0, %v942
        %944 = vmatmul.bf16.gmra.mxu0 %v796
        %v945 = vpop.f32.mrf.mxu0
        %v946 = vadd.f32 0.0, %v945
        %v947 = vpop.f32.mrf.mxu0
        %v948 = vadd.f32 0.0, %v947
        %949 = vmatmul.bf16.gmra.mxu0 %v799
        %v950 = vpop.f32.mrf.mxu0
        %v951 = vadd.f32 0.0, %v950
        %v952 = vpop.f32.mrf.mxu0
        %v953 = vadd.f32 0.0, %v952
        %954 = vmatmul.bf16.gmra.mxu0 %v802
        %v955 = vpop.f32.mrf.mxu0
        %v956 = vadd.f32 0.0, %v955
        %v957 = vpop.f32.mrf.mxu0
        %v958 = vadd.f32 0.0, %v957
        %959 = vmatmul.bf16.gmra.mxu0 %v805
        %v960 = vpop.f32.mrf.mxu0
        %v961 = vadd.f32 0.0, %v960
        %v962 = vpop.f32.mrf.mxu0
        %v963 = vadd.f32 0.0, %v962
        %964 = vmatmul.bf16.gmra.mxu0 %v808
        %v965 = vpop.f32.mrf.mxu0
        %v966 = vadd.f32 0.0, %v965
        %v967 = vpop.f32.mrf.mxu0
        %v968 = vadd.f32 0.0, %v967
        %969 = vmatmul.bf16.gmra.mxu0 %v811
        %v970 = vpop.f32.mrf.mxu0
        %v971 = vadd.f32 0.0, %v970
        %v972 = vpop.f32.mrf.mxu0
        %v973 = vadd.f32 0.0, %v972
        %974 = vmatmul.bf16.gmra.mxu0 %v814
        %v975 = vpop.f32.mrf.mxu0
        %v976 = vadd.f32 0.0, %v975
        %v977 = vpop.f32.mrf.mxu0
        %v978 = vadd.f32 0.0, %v977
        %979 = vmatmul.bf16.gmra.mxu0 %v817
        %v980 = vpop.f32.mrf.mxu0
        %v981 = vadd.f32 0.0, %v980
        %v982 = vpop.f32.mrf.mxu0
        %v983 = vadd.f32 0.0, %v982
        %984 = vmatmul.bf16.gmra.mxu0 %v820
        %v985 = vpop.f32.mrf.mxu0
        %v986 = vadd.f32 0.0, %v985
        %v987 = vpop.f32.mrf.mxu0
        %v988 = vadd.f32 0.0, %v987
        %989 = vmatmul.bf16.gmra.mxu0 %v823
        %v990 = vpop.f32.mrf.mxu0
        %v991 = vadd.f32 0.0, %v990
        %v992 = vpop.f32.mrf.mxu0
        %v993 = vadd.f32 0.0, %v992
        %994 = vmatmul.bf16.gmra.mxu0 %v826
        %v995 = vpop.f32.mrf.mxu0
        %v996 = vadd.f32 0.0, %v995
        %v997 = vpop.f32.mrf.mxu0
        %v998 = vadd.f32 0.0, %v997
        %999 = vmatmul.bf16.gmra.mxu0 %v829
        %v1000 = vpop.f32.mrf.mxu0
        %v1001 = vadd.f32 0.0, %v1000
        %v1002 = vpop.f32.mrf.mxu0
        %v1003 = vadd.f32 0.0, %v1002
        %1004 = vmatmul.bf16.gmra.mxu0 %v832
        %v1005 = vpop.f32.mrf.mxu0
        %v1006 = vadd.f32 0.0, %v1005
        %v1007 = vpop.f32.mrf.mxu0
        %v1008 = vadd.f32 0.0, %v1007
        %1009 = vmatmul.bf16.gmra.mxu0 %v835
        %v1010 = vpop.f32.mrf.mxu0
        %v1011 = vadd.f32 0.0, %v1010
        %v1012 = vpop.f32.mrf.mxu0
        %v1013 = vadd.f32 0.0, %v1012
        %1014 = vdwg.mxu0
        %v1015 = vmax.f32 %v847, %v852
        %v1016 = vmax.f32 %v849, %v854
        %v1017 = vmax.f32 %v1015, %v857
        %v1018 = vmax.f32 %v1016, %v859
        %v1019 = vmax.f32 %v1017, %v862
        %v1020 = vmax.f32 %v1018, %v864
        %v1021 = vmax.f32 %v1019, %v867
        %v1022 = vmax.f32 %v1020, %v869
        %v1023 = vmax.f32 %v1021, %v872
        %v1024 = vmax.f32 %v1022, %v874
        %v1025 = vmax.f32 %v1023, %v877
        %v1026 = vmax.f32 %v1024, %v879
        %v1027 = vmax.f32 %v1025, %v882
        %v1028 = vmax.f32 %v1026, %v884
        %v1029 = vmax.f32 %v1027, %v887
        %v1030 = vmax.f32 %v1028, %v889
        %v1031 = vmax.f32 %v1029, %v892
        %v1032 = vmax.f32 %v1030, %v894
        %v1033 = vmax.f32 %v1031, %v897
        %v1034 = vmax.f32 %v1032, %v899
        %v1035 = vmax.f32 %v1033, %v902
        %v1036 = vmax.f32 %v1034, %v904
        %v1037 = vmax.f32 %v1035, %v907
        %v1038 = vmax.f32 %v1036, %v909
        %v1039 = vmax.f32 %v1037, %v912
        %v1040 = vmax.f32 %v1038, %v914
        %v1041 = vmax.f32 %v1039, %v917
        %v1042 = vmax.f32 %v1040, %v919
        %v1043 = vmax.f32 %v1041, %v922
        %v1044 = vmax.f32 %v1042, %v924
        %v1045 = vmax.f32 %v1043, %v1044
        %v1046 = vrot.slane %v1045, 4
        %v1047 = vmax.f32 %v1045, %v1046
        %v1048 = vrot.slane %v1047, 2
        %v1049 = vmax.f32 %v1047, %v1048
        %v1050 = vrot.slane %v1049, 1
        %v1051 = vmax.f32 %v1049, %v1050
        %v1052 = vmax.f32 %v936, %v941
        %v1053 = vmax.f32 %v938, %v943
        %v1054 = vmax.f32 %v1052, %v946
        %v1055 = vmax.f32 %v1053, %v948
        %v1056 = vmax.f32 %v1054, %v951
        %v1057 = vmax.f32 %v1055, %v953
        %v1058 = vmax.f32 %v1056, %v956
        %v1059 = vmax.f32 %v1057, %v958
        %v1060 = vmax.f32 %v1058, %v961
        %v1061 = vmax.f32 %v1059, %v963
        %v1062 = vmax.f32 %v1060, %v966
        %v1063 = vmax.f32 %v1061, %v968
        %v1064 = vmax.f32 %v1062, %v971
        %v1065 = vmax.f32 %v1063, %v973
        %v1066 = vmax.f32 %v1064, %v976
        %v1067 = vmax.f32 %v1065, %v978
        %v1068 = vmax.f32 %v1066, %v981
        %v1069 = vmax.f32 %v1067, %v983
        %v1070 = vmax.f32 %v1068, %v986
        %v1071 = vmax.f32 %v1069, %v988
        %v1072 = vmax.f32 %v1070, %v991
        %v1073 = vmax.f32 %v1071, %v993
        %v1074 = vmax.f32 %v1072, %v996
        %v1075 = vmax.f32 %v1073, %v998
        %v1076 = vmax.f32 %v1074, %v1001
        %v1077 = vmax.f32 %v1075, %v1003
        %v1078 = vmax.f32 %v1076, %v1006
        %v1079 = vmax.f32 %v1077, %v1008
        %v1080 = vmax.f32 %v1078, %v1011
        %v1081 = vmax.f32 %v1079, %v1013
        %v1082 = vmax.f32 %v1080, %v1081
        %v1083 = vrot.slane %v1082, 4
        %v1084 = vmax.f32 %v1082, %v1083
        %v1085 = vrot.slane %v1084, 2
        %v1086 = vmax.f32 %v1084, %v1085
        %v1087 = vrot.slane %v1086, 1
        %v1088 = vmax.f32 %v1086, %v1087
        %v1089 = vsub.f32 %v847, %v1051
        %v1090 = vsub.f32 %v936, %v1088
        %v1091 = vsub.f32 %v849, %v1051
        %v1092 = vsub.f32 %v938, %v1088
        %v1093 = vsub.f32 %v852, %v1051
        %v1094 = vsub.f32 %v941, %v1088
        %v1095 = vsub.f32 %v854, %v1051
        %v1096 = vsub.f32 %v943, %v1088
        %v1097 = vsub.f32 %v857, %v1051
        %v1098 = vsub.f32 %v946, %v1088
        %v1099 = vsub.f32 %v859, %v1051
        %v1100 = vsub.f32 %v948, %v1088
        %v1101 = vsub.f32 %v862, %v1051
        %v1102 = vsub.f32 %v951, %v1088
        %v1103 = vsub.f32 %v864, %v1051
        %v1104 = vsub.f32 %v953, %v1088
        %v1105 = vsub.f32 %v867, %v1051
        %v1106 = vsub.f32 %v956, %v1088
        %v1107 = vsub.f32 %v869, %v1051
        %v1108 = vsub.f32 %v958, %v1088
        %v1109 = vsub.f32 %v872, %v1051
        %v1110 = vsub.f32 %v961, %v1088
        %v1111 = vsub.f32 %v874, %v1051
        %v1112 = vsub.f32 %v963, %v1088
        %v1113 = vsub.f32 %v877, %v1051
        %v1114 = vsub.f32 %v966, %v1088
        %v1115 = vsub.f32 %v879, %v1051
        %v1116 = vsub.f32 %v968, %v1088
        %v1117 = vsub.f32 %v882, %v1051
        %v1118 = vsub.f32 %v971, %v1088
        %v1119 = vsub.f32 %v884, %v1051
        %v1120 = vsub.f32 %v973, %v1088
        %v1121 = vsub.f32 %v887, %v1051
        %v1122 = vsub.f32 %v976, %v1088
        %v1123 = vsub.f32 %v889, %v1051
        %v1124 = vsub.f32 %v978, %v1088
        %v1125 = vsub.f32 %v892, %v1051
        %v1126 = vsub.f32 %v981, %v1088
        %v1127 = vsub.f32 %v894, %v1051
        %v1128 = vsub.f32 %v983, %v1088
        %v1129 = vsub.f32 %v897, %v1051
        %v1130 = vsub.f32 %v986, %v1088
        %v1131 = vsub.f32 %v899, %v1051
        %v1132 = vsub.f32 %v988, %v1088
        %v1133 = vsub.f32 %v902, %v1051
        %v1134 = vsub.f32 %v991, %v1088
        %v1135 = vsub.f32 %v904, %v1051
        %v1136 = vsub.f32 %v993, %v1088
        %v1137 = vsub.f32 %v907, %v1051
        %v1138 = vsub.f32 %v996, %v1088
        %v1139 = vsub.f32 %v909, %v1051
        %v1140 = vsub.f32 %v998, %v1088
        %v1141 = vsub.f32 %v912, %v1051
        %v1142 = vsub.f32 %v1001, %v1088
        %v1143 = vsub.f32 %v914, %v1051
        %v1144 = vsub.f32 %v1003, %v1088
        %v1145 = vsub.f32 %v917, %v1051
        %v1146 = vsub.f32 %v1006, %v1088
        %v1147 = vsub.f32 %v919, %v1051
        %v1148 = vsub.f32 %v1008, %v1088
        %v1149 = vsub.f32 %v922, %v1051
        %v1150 = vsub.f32 %v1011, %v1088
        %v1151 = vsub.f32 %v924, %v1051
        %v1152 = vsub.f32 %v1013, %v1088
        %v1153 = vmul.f32 %v1089, 1.442695
        %v1154 = vpow.pop %v1153
        %v1155 = vmul.f32 %v1090, 1.442695
        %v1156 = vpow.pop %v1155
        %v1157 = vmul.f32 %v1091, 1.442695
        %v1158 = vpow.pop %v1157
        %v1159 = vmul.f32 %v1092, 1.442695
        %v1160 = vpow.pop %v1159
        %v1161 = vmul.f32 %v1093, 1.442695
        %v1162 = vpow.pop %v1161
        %v1163 = vmul.f32 %v1094, 1.442695
        %v1164 = vpow.pop %v1163
        %v1165 = vmul.f32 %v1095, 1.442695
        %v1166 = vpow.pop %v1165
        %v1167 = vmul.f32 %v1096, 1.442695
        %v1168 = vpow.pop %v1167
        %v1169 = vmul.f32 %v1097, 1.442695
        %v1170 = vpow.pop %v1169
        %v1171 = vmul.f32 %v1098, 1.442695
        %v1172 = vpow.pop %v1171
        %v1173 = vmul.f32 %v1099, 1.442695
        %v1174 = vpow.pop %v1173
        %v1175 = vmul.f32 %v1100, 1.442695
        %v1176 = vpow.pop %v1175
        %v1177 = vmul.f32 %v1101, 1.442695
        %v1178 = vpow.pop %v1177
        %v1179 = vmul.f32 %v1102, 1.442695
        %v1180 = vpow.pop %v1179
        %v1181 = vmul.f32 %v1103, 1.442695
        %v1182 = vpow.pop %v1181
        %v1183 = vmul.f32 %v1104, 1.442695
        %v1184 = vpow.pop %v1183
        %v1185 = vmul.f32 %v1105, 1.442695
        %v1186 = vpow.pop %v1185
        %v1187 = vmul.f32 %v1106, 1.442695
        %v1188 = vpow.pop %v1187
        %v1189 = vmul.f32 %v1107, 1.442695
        %v1190 = vpow.pop %v1189
        %v1191 = vmul.f32 %v1108, 1.442695
        %v1192 = vpow.pop %v1191
        %v1193 = vmul.f32 %v1109, 1.442695
        %v1194 = vpow.pop %v1193
        %v1195 = vmul.f32 %v1110, 1.442695
        %v1196 = vpow.pop %v1195
        %v1197 = vmul.f32 %v1111, 1.442695
        %v1198 = vpow.pop %v1197
        %v1199 = vmul.f32 %v1112, 1.442695
        %v1200 = vpow.pop %v1199
        %v1201 = vmul.f32 %v1113, 1.442695
        %v1202 = vpow.pop %v1201
        %v1203 = vmul.f32 %v1114, 1.442695
        %v1204 = vpow.pop %v1203
        %v1205 = vmul.f32 %v1115, 1.442695
        %v1206 = vpow.pop %v1205
        %v1207 = vmul.f32 %v1116, 1.442695
        %v1208 = vpow.pop %v1207
        %v1209 = vmul.f32 %v1117, 1.442695
        %v1210 = vpow.pop %v1209
        %v1211 = vmul.f32 %v1118, 1.442695
        %v1212 = vpow.pop %v1211
        %v1213 = vmul.f32 %v1119, 1.442695
        %v1214 = vpow.pop %v1213
        %v1215 = vmul.f32 %v1120, 1.442695
        %v1216 = vpow.pop %v1215
        %v1217 = vmul.f32 %v1121, 1.442695
        %v1218 = vpow.pop %v1217
        %v1219 = vmul.f32 %v1122, 1.442695
        %v1220 = vpow.pop %v1219
        %v1221 = vmul.f32 %v1123, 1.442695
        %v1222 = vpow.pop %v1221
        %v1223 = vmul.f32 %v1124, 1.442695
        %v1224 = vpow.pop %v1223
        %v1225 = vmul.f32 %v1125, 1.442695
        %v1226 = vpow.pop %v1225
        %v1227 = vmul.f32 %v1126, 1.442695
        %v1228 = vpow.pop %v1227
        %v1229 = vmul.f32 %v1127, 1.442695
        %v1230 = vpow.pop %v1229
        %v1231 = vmul.f32 %v1128, 1.442695
        %v1232 = vpow.pop %v1231
        %v1233 = vmul.f32 %v1129, 1.442695
        %v1234 = vpow.pop %v1233
        %v1235 = vmul.f32 %v1130, 1.442695
        %v1236 = vpow.pop %v1235
        %v1237 = vmul.f32 %v1131, 1.442695
        %v1238 = vpow.pop %v1237
        %v1239 = vmul.f32 %v1132, 1.442695
        %v1240 = vpow.pop %v1239
        %v1241 = vmul.f32 %v1133, 1.442695
        %v1242 = vpow.pop %v1241
        %v1243 = vmul.f32 %v1134, 1.442695
        %v1244 = vpow.pop %v1243
        %v1245 = vmul.f32 %v1135, 1.442695
        %v1246 = vpow.pop %v1245
        %v1247 = vmul.f32 %v1136, 1.442695
        %v1248 = vpow.pop %v1247
        %v1249 = vmul.f32 %v1137, 1.442695
        %v1250 = vpow.pop %v1249
        %v1251 = vmul.f32 %v1138, 1.442695
        %v1252 = vpow.pop %v1251
        %v1253 = vmul.f32 %v1139, 1.442695
        %v1254 = vpow.pop %v1253
        %v1255 = vmul.f32 %v1140, 1.442695
        %v1256 = vpow.pop %v1255
        %v1257 = vmul.f32 %v1141, 1.442695
        %v1258 = vpow.pop %v1257
        %v1259 = vmul.f32 %v1142, 1.442695
        %v1260 = vpow.pop %v1259
        %v1261 = vmul.f32 %v1143, 1.442695
        %v1262 = vpow.pop %v1261
        %v1263 = vmul.f32 %v1144, 1.442695
        %v1264 = vpow.pop %v1263
        %v1265 = vmul.f32 %v1145, 1.442695
        %v1266 = vpow.pop %v1265
        %v1267 = vmul.f32 %v1146, 1.442695
        %v1268 = vpow.pop %v1267
        %v1269 = vmul.f32 %v1147, 1.442695
        %v1270 = vpow.pop %v1269
        %v1271 = vmul.f32 %v1148, 1.442695
        %v1272 = vpow.pop %v1271
        %v1273 = vmul.f32 %v1149, 1.442695
        %v1274 = vpow.pop %v1273
        %v1275 = vmul.f32 %v1150, 1.442695
        %v1276 = vpow.pop %v1275
        %v1277 = vmul.f32 %v1151, 1.442695
        %v1278 = vpow.pop %v1277
        %v1279 = vmul.f32 %v1152, 1.442695
        %v1280 = vpow.pop %v1279
        %v1281 = vadd.f32 %v1154, %v1158
        %v1282 = vadd.f32 %v1281, %v1162
        %v1283 = vadd.f32 %v1282, %v1166
        %v1284 = vadd.f32 %v1283, %v1170
        %v1285 = vadd.f32 %v1284, %v1174
        %v1286 = vadd.f32 %v1285, %v1178
        %v1287 = vadd.f32 %v1286, %v1182
        %v1288 = vadd.f32 %v1287, %v1186
        %v1289 = vadd.f32 %v1288, %v1190
        %v1290 = vadd.f32 %v1289, %v1194
        %v1291 = vadd.f32 %v1290, %v1198
        %v1292 = vadd.f32 %v1291, %v1202
        %v1293 = vadd.f32 %v1292, %v1206
        %v1294 = vadd.f32 %v1293, %v1210
        %v1295 = vadd.f32 %v1294, %v1214
        %v1296 = vadd.f32 %v1295, %v1218
        %v1297 = vadd.f32 %v1296, %v1222
        %v1298 = vadd.f32 %v1297, %v1226
        %v1299 = vadd.f32 %v1298, %v1230
        %v1300 = vadd.f32 %v1299, %v1234
        %v1301 = vadd.f32 %v1300, %v1238
        %v1302 = vadd.f32 %v1301, %v1242
        %v1303 = vadd.f32 %v1302, %v1246
        %v1304 = vadd.f32 %v1303, %v1250
        %v1305 = vadd.f32 %v1304, %v1254
        %v1306 = vadd.f32 %v1305, %v1258
        %v1307 = vadd.f32 %v1306, %v1262
        %v1308 = vadd.f32 %v1307, %v1266
        %v1309 = vadd.f32 %v1308, %v1270
        %v1310 = vadd.f32 %v1309, %v1274
        %v1311 = vadd.f32 %v1310, %v1278
        %v1312 = vrot.slane %v1311, 4
        %v1313 = vadd.f32 %v1311, %v1312
        %v1314 = vrot.slane %v1313, 2
        %v1315 = vadd.f32 %v1313, %v1314
        %v1316 = vrot.slane %v1315, 1
        %v1317 = vadd.f32 %v1315, %v1316
        %v1318 = vadd.f32 %v1156, %v1160
        %v1319 = vadd.f32 %v1318, %v1164
        %v1320 = vadd.f32 %v1319, %v1168
        %v1321 = vadd.f32 %v1320, %v1172
        %v1322 = vadd.f32 %v1321, %v1176
        %v1323 = vadd.f32 %v1322, %v1180
        %v1324 = vadd.f32 %v1323, %v1184
        %v1325 = vadd.f32 %v1324, %v1188
        %v1326 = vadd.f32 %v1325, %v1192
        %v1327 = vadd.f32 %v1326, %v1196
        %v1328 = vadd.f32 %v1327, %v1200
        %v1329 = vadd.f32 %v1328, %v1204
        %v1330 = vadd.f32 %v1329, %v1208
        %v1331 = vadd.f32 %v1330, %v1212
        %v1332 = vadd.f32 %v1331, %v1216
        %v1333 = vadd.f32 %v1332, %v1220
        %v1334 = vadd.f32 %v1333, %v1224
        %v1335 = vadd.f32 %v1334, %v1228
        %v1336 = vadd.f32 %v1335, %v1232
        %v1337 = vadd.f32 %v1336, %v1236
        %v1338 = vadd.f32 %v1337, %v1240
        %v1339 = vadd.f32 %v1338, %v1244
        %v1340 = vadd.f32 %v1339, %v1248
        %v1341 = vadd.f32 %v1340, %v1252
        %v1342 = vadd.f32 %v1341, %v1256
        %v1343 = vadd.f32 %v1342, %v1260
        %v1344 = vadd.f32 %v1343, %v1264
        %v1345 = vadd.f32 %v1344, %v1268
        %v1346 = vadd.f32 %v1345, %v1272
        %v1347 = vadd.f32 %v1346, %v1276
        %v1348 = vadd.f32 %v1347, %v1280
        %v1349 = vrot.slane %v1348, 4
        %v1350 = vadd.f32 %v1348, %v1349
        %v1351 = vrot.slane %v1350, 2
        %v1352 = vadd.f32 %v1350, %v1351
        %v1353 = vrot.slane %v1352, 1
        %v1354 = vadd.f32 %v1352, %v1353
        %v1355 = vld [vmem:[#allocation3] sm:$0xff]
        %v1356 = vld [vmem:[#allocation3 + $0x8] sm:$0xff]
        %v1357 = vld [vmem:[#allocation3 + $0x10] sm:$0xff]
        %v1358 = vld [vmem:[#allocation3 + $0x18] sm:$0xff]
        %v1359 = vpack.c.bf16 %v1158, %v1154
        %v1360 = vpack.c.bf16 %v1160, %v1156
        %v1361 = vpack.c.bf16 %v1166, %v1162
        %v1362 = vpack.c.bf16 %v1168, %v1164
        %v1363 = vpack.c.bf16 %v1174, %v1170
        %v1364 = vpack.c.bf16 %v1176, %v1172
        %v1365 = vpack.c.bf16 %v1182, %v1178
        %v1366 = vpack.c.bf16 %v1184, %v1180
        %v1367 = vpack.c.bf16 %v1190, %v1186
        %v1368 = vpack.c.bf16 %v1192, %v1188
        %v1369 = vpack.c.bf16 %v1198, %v1194
        %v1370 = vpack.c.bf16 %v1200, %v1196
        %v1371 = vpack.c.bf16 %v1206, %v1202
        %v1372 = vpack.c.bf16 %v1208, %v1204
        %v1373 = vpack.c.bf16 %v1214, %v1210
        %v1374 = vpack.c.bf16 %v1216, %v1212
        %v1375 = vpack.c.bf16 %v1222, %v1218
        %v1376 = vpack.c.bf16 %v1224, %v1220
        %v1377 = vpack.c.bf16 %v1230, %v1226
        %v1378 = vpack.c.bf16 %v1232, %v1228
        %v1379 = vpack.c.bf16 %v1238, %v1234
        %v1380 = vpack.c.bf16 %v1240, %v1236
        %v1381 = vpack.c.bf16 %v1246, %v1242
        %v1382 = vpack.c.bf16 %v1248, %v1244
        %v1383 = vpack.c.bf16 %v1254, %v1250
        %v1384 = vpack.c.bf16 %v1256, %v1252
        %v1385 = vpack.c.bf16 %v1262, %v1258
        %v1386 = vpack.c.bf16 %v1264, %v1260
        %v1387 = vpack.c.bf16 %v1270, %v1266
        %v1388 = vpack.c.bf16 %v1272, %v1268
        %v1389 = vpack.c.bf16 %v1278, %v1274
        %v1390 = vpack.c.bf16 %v1280, %v1276
        %v1395 = vunpack.c.l.b16 %v1355
        %v1396 = vunpack.c.h.b16 %v1355
        %v1397 = vunpack.c.l.b16 %v1356
        %v1398 = vunpack.c.h.b16 %v1356
        %v1399 = vunpack.c.l.b16 %v1357
        %v1400 = vunpack.c.h.b16 %v1357
        %v1401 = vunpack.c.l.b16 %v1358
        %v1402 = vunpack.c.h.b16 %v1358
        %v1403 = vpack.c.b16 %v1397, %v1395
        %v1404 = vpack.c.b16 %v1398, %v1396
        %v1405 = vpack.c.b16 %v1401, %v1399
        %v1406 = vpack.c.b16 %v1402, %v1400
        %1411 = vmatpush.bf16.msra.mxu0 %v1373
        %1412 = vmatpush.bf16.msra.mxu0 %v1371
        %1413 = vmatpush.bf16.msra.mxu0 %v1369
        %1414 = vmatpush.bf16.msra.mxu0 %v1367
        %1415 = vmatpush.bf16.msra.mxu0 %v1365
        %1416 = vmatpush.bf16.msra.mxu0 %v1363
        %1417 = vmatpush.bf16.msra.mxu0 %v1361
        %1418 = vmatpush.bf16.msra.mxu0 %v1359
        %1419 = vmatmul.bf16.gmra.mxu0 %v1403
        %v1420 = vpop.f32.mrf.mxu0
        %v1421 = vadd.f32 0.0, %v1420
        %v1422 = vpop.f32.mrf.mxu0
        %v1423 = vadd.f32 0.0, %v1422
        %1424 = vmatmul.bf16.gmra.mxu0 %v1405
        %v1425 = vpop.f32.mrf.mxu0
        %v1426 = vadd.f32 0.0, %v1425
        %v1427 = vpop.f32.mrf.mxu0
        %v1428 = vadd.f32 0.0, %v1427
        %1429 = vdwg.mxu0
        %1430 = vmatpush.bf16.msra.mxu0 %v1389
        %1431 = vmatpush.bf16.msra.mxu0 %v1387
        %1432 = vmatpush.bf16.msra.mxu0 %v1385
        %1433 = vmatpush.bf16.msra.mxu0 %v1383
        %1434 = vmatpush.bf16.msra.mxu0 %v1381
        %1435 = vmatpush.bf16.msra.mxu0 %v1379
        %1436 = vmatpush.bf16.msra.mxu0 %v1377
        %1437 = vmatpush.bf16.msra.mxu0 %v1375
        %1438 = vmatmul.bf16.gmra.mxu0 %v1404
        %v1439 = vpop.f32.mrf.mxu0
        %v1440 = vadd.f32 %v1421, %v1439
        %v1441 = vpop.f32.mrf.mxu0
        %v1442 = vadd.f32 %v1423, %v1441
        %1443 = vmatmul.bf16.gmra.mxu0 %v1406
        %v1444 = vpop.f32.mrf.mxu0
        %v1445 = vadd.f32 %v1426, %v1444
        %v1446 = vpop.f32.mrf.mxu0
        %v1447 = vadd.f32 %v1428, %v1446
        %1448 = vdwg.mxu0
        %1449 = vmatpush.bf16.msra.mxu0 %v1374
        %1450 = vmatpush.bf16.msra.mxu0 %v1372
        %1451 = vmatpush.bf16.msra.mxu0 %v1370
        %1452 = vmatpush.bf16.msra.mxu0 %v1368
        %1453 = vmatpush.bf16.msra.mxu0 %v1366
        %1454 = vmatpush.bf16.msra.mxu0 %v1364
        %1455 = vmatpush.bf16.msra.mxu0 %v1362
        %1456 = vmatpush.bf16.msra.mxu0 %v1360
        %1457 = vmatmul.bf16.gmra.mxu0 %v1403
        %v1458 = vpop.f32.mrf.mxu0
        %v1459 = vadd.f32 0.0, %v1458
        %v1460 = vpop.f32.mrf.mxu0
        %v1461 = vadd.f32 0.0, %v1460
        %1462 = vmatmul.bf16.gmra.mxu0 %v1405
        %v1463 = vpop.f32.mrf.mxu0
        %v1464 = vadd.f32 0.0, %v1463
        %v1465 = vpop.f32.mrf.mxu0
        %v1466 = vadd.f32 0.0, %v1465
        %1467 = vdwg.mxu0
        %1468 = vmatpush.bf16.msra.mxu0 %v1390
        %1469 = vmatpush.bf16.msra.mxu0 %v1388
        %1470 = vmatpush.bf16.msra.mxu0 %v1386
        %1471 = vmatpush.bf16.msra.mxu0 %v1384
        %1472 = vmatpush.bf16.msra.mxu0 %v1382
        %1473 = vmatpush.bf16.msra.mxu0 %v1380
        %1474 = vmatpush.bf16.msra.mxu0 %v1378
        %1475 = vmatpush.bf16.msra.mxu0 %v1376
        %1476 = vmatmul.bf16.gmra.mxu0 %v1404
        %v1477 = vpop.f32.mrf.mxu0
        %v1478 = vadd.f32 %v1459, %v1477
        %v1479 = vpop.f32.mrf.mxu0
        %v1480 = vadd.f32 %v1461, %v1479
        %1481 = vmatmul.bf16.gmra.mxu0 %v1406
        %v1482 = vpop.f32.mrf.mxu0
        %v1483 = vadd.f32 %v1464, %v1482
        %v1484 = vpop.f32.mrf.mxu0
        %v1485 = vadd.f32 %v1466, %v1484
        %1486 = vdwg.mxu0
        %v1487 = vrcp.pop %v1317
        %v1488 = vrcp.pop %v1354
        %v1489 = vmul.f32 %v1440, %v1487
        %v1490 = vmul.f32 %v1478, %v1488
        %v1491 = vmul.f32 %v1442, %v1487
        %v1492 = vmul.f32 %v1480, %v1488
        %v1493 = vmul.f32 %v1445, %v1487
        %v1494 = vmul.f32 %v1483, %v1488
        %v1495 = vmul.f32 %v1447, %v1487
        %v1496 = vmul.f32 %v1485, %v1488
        %1497 = vst [vmem:[%s265] sm:$0xff] %v1489
        %1498 = vst [vmem:[%s265 + $0x8] sm:$0xff] %v1490
        %1499 = vst [vmem:[%s265 + $0x10] sm:$0xff] %v1491
        %1500 = vst [vmem:[%s265 + $0x18] sm:$0xff] %v1492
        %1501 = vst [vmem:[%s265 + $0x20] sm:$0xff] %v1493
        %1502 = vst [vmem:[%s265 + $0x28] sm:$0xff] %v1494
        %1503 = vst [vmem:[%s265 + $0x30] sm:$0xff] %v1495
        %1504 = vst [vmem:[%s265 + $0x38] sm:$0xff] %v1496
        %s1505 = sand.u32 %s153, 1
        %s1506 = scalar_lea.sflag [#allocation6], %s1505
        %s1507 = sand.u32 %s153, 1
        %s1508 = smul.addr %s1507, 64
        %s1509 = scalar_lea.vmem [#allocation9], %s1508
        // Predicated region
        $region53: #{tpu_custom_call.1} parent=39 // pred_check
          %p1510 = pneg %p163
        $region54: #{tpu_custom_call.1} parent=39 // pred_check_branch
          %1512 = sbr.rel (%p1510) target = $region56
        $region55: #{tpu_custom_call.1} parent=39 // pred_region
          %s1513 = smul.u32 2, %s26
          %1515 = vsyncadd %s1506, 0
          %s1516 = smul.addr %s25, 8
          %s1517 = sadd.s32 %s1513, %s1516
          %s1518 = smul.addr %s1517, 8
          %s1519 = scalar_lea.hbm %s5, %s1518
          %s1520 = sshll.u32 %s1509, 4
          %s1521 = int_to_ptr.vmem [resolvable:$true] %s1520
          %s1522 = sshll.u32 %s1519, 4
          %s1523 = int_to_ptr.hbm [resolvable:$true] %s1522
          %1528 = dma.vmem_to_hbm [thread:$0]  %s1521, 1024, %s1523, %s1506, 256, 256, 16
        $region56: #{tpu_custom_call.1} parent=39 // pred_fallthru
          _
      $region40: #{tpu_custom_call.1} parent=5 // pred_fallthru
        _
      %p1529 = scmp.le.s32.totalorder 2, %s16
      // Predicated region
      $region57: #{tpu_custom_call.1} parent=5 // pred_check
        %p1530 = pneg %p1529
      $region58: #{tpu_custom_call.1} parent=5 // pred_check_branch
        %1532 = sbr.rel (%p1530) target = $region60
      $region59: #{tpu_custom_call.1} parent=5 // pred_region
        %s1533 = ssub.s32 %s16, 2
        // Predicated region
        $region61: #{tpu_custom_call.1} parent=59 // pred_check
          %p1534 = pneg %p169
        $region62: #{tpu_custom_call.1} parent=59 // pred_check_branch
          %1536 = sbr.rel (%p1534) target = $region64
        $region63: #{tpu_custom_call.1} parent=59 // pred_region
          %s1537 = sand.u32 %s154, 1
          %s1538 = scalar_lea.sflag [#allocation6], %s1537
          %s1539 = sand.u32 %s154, 1
          %s1540 = smul.addr %s1539, 64
          %s1541 = scalar_lea.vmem [#allocation9], %s1540
          %1543 = dma.done %s1538, 1024
        $region64: #{tpu_custom_call.1} parent=59 // pred_fallthru
          _
      $region60: #{tpu_custom_call.1} parent=5 // pred_fallthru
        _
    $region6: #{tpu_custom_call.1} parent=1 // loop_footer
      %s20 = sadd.s32 1, %s16
    $region7: #{tpu_custom_call.1} parent=1 // loop_footer_branch
      %15 = sbr.rel target = $region3
    $region8: #{tpu_custom_call.1} parent=1 // loop_exit
      _
    %1544 = vsyncpa [#allocation5], 1
    %s1545 = scalar_lea.sflag [#allocation5], 1
    %1546 = vsyncpa %s1545, 1
    %1547 = vsyncpa [#allocation8], 1
    %1548 = vsyncpa [#allocation6], 1
    %s1549 = scalar_lea.sflag [#allocation6], 1
    %1550 = vsyncpa %s1549, 1

</llo_original>
